<compile_context>
chip_gen: v5e
topology: v5e:2x2
jax: 0.10.0
libtpu: 0.0.40
codegen_flags: <defaults>
</compile_context>

<pallas_src>
import functools

import jax
import jax.numpy as jnp
from jax.experimental import pallas as pl
from jax.experimental.pallas import tpu as pltpu


def _round_up(x, m):
    return (x + m - 1) // m * m


def _pick_tile(M, block_m, bytes_per_row, io_budget_bytes):
    """Pick the row-tile size (tm) and the padded row count (Mp).

    Preference:
      1. a multiple-of-8 tile that divides M exactly  -> no wrapper pad/slice
      2. otherwise the target tile, with M padded up to a multiple of it.
    The target is capped so double-buffered input+output tiles fit the I/O
    budget, and (when M is large enough) so the grid has >= 2 steps for the
    two v7x TensorCores.
    """
    cap = max(8, io_budget_bytes // (2 * bytes_per_row))
    target = min(block_m, cap)
    if M >= 16:
        target = min(target, M // 2)          # keep grid >= 2 (megacore balance)
    target = max(8, (target // 8) * 8)

    if M % 8 == 0:
        floor = max(8, ((target // 4) // 8) * 8)   # never accept pathologically tiny tiles
        tm = target
        while tm >= floor:
            if M % tm == 0:
                return tm, M
            tm -= 8

    tm = min(target, _round_up(M, 8))
    return tm, _round_up(M, tm)


def _self_attention_kernel(cout, x1_ref, x2_ref, w1_ref, w2_ref, o_ref):
    x1 = x1_ref[...]
    x2 = x2_ref[...]

    # Two fused MXU matmuls against [Wv | Wk | Wq] (f32 accumulate).
    # HIGHEST keeps exact-f32 semantics; MXU has huge slack in this HBM-bound
    # regime so the extra passes are hidden.
    hi = jax.lax.Precision.HIGHEST
    p1 = jnp.dot(x1, w1_ref[...], preferred_element_type=jnp.float32, precision=hi)
    p2 = jnp.dot(x2, w2_ref[...], preferred_element_type=jnp.float32, precision=hi)

    v1, k1, q1 = p1[:, :cout], p1[:, cout:2 * cout], p1[:, 2 * cout:]
    v2, k2, q2 = p2[:, :cout], p2[:, cout:2 * cout], p2[:, 2 * cout:]

    # Per-row attention logits: <k, q> over the channel axis -> (tm, 1).
    s11 = jnp.sum(k1 * q1, axis=-1, keepdims=True)
    s12 = jnp.sum(k2 * q1, axis=-1, keepdims=True)
    s21 = jnp.sum(k1 * q2, axis=-1, keepdims=True)
    s22 = jnp.sum(k2 * q2, axis=-1, keepdims=True)

    # Numerically-stable 2-way softmax, fully elementwise (VPU + EUP).
    # Exact divide on purpose: approx reciprocal can exceed the 1e-4 tolerance.
    m1 = jnp.maximum(s11, s12)
    e11 = jnp.exp(s11 - m1)
    e12 = jnp.exp(s12 - m1)
    inv1 = 1.0 / (e11 + e12)
    a1_0, a1_1 = e11 * inv1, e12 * inv1

    m2 = jnp.maximum(s21, s22)
    e21 = jnp.exp(s21 - m2)
    e22 = jnp.exp(s22 - m2)
    inv2 = 1.0 / (e21 + e22)
    a2_0, a2_1 = e21 * inv2, e22 * inv2

    t3 = v1 * a1_0
    t4 = v2 * a1_1
    t5 = v1 * a2_0
    t6 = v2 * a2_1

    # One lane-dense (tm, 6*Cout) store instead of six masked 32-lane stores.
    fused = jnp.concatenate([t3 + t4, t5 + t6, t3, t4, t5, t6], axis=-1)
    o_ref[...] = fused.astype(o_ref.dtype)


@functools.partial(jax.jit, static_argnames=("block_m",))
def self_attention(tensor1, tensor2, wv1, wk1, wq1, wv2, wk2, wq2, *, block_m=2048):
    """tensor1/tensor2: (B, T, N, Cin); weights: (Cin, Cout) (= torch weight.T).

    Returns the 6 output tensors of the PyTorch forward, each (B, T, N, Cout).
    """
    B, T, N, Cin = tensor1.shape
    Cout = wv1.shape[1]
    M = B * T * N

    x1 = tensor1.reshape(M, Cin)
    x2 = tensor2.reshape(M, Cin)

    # Fuse the three per-input projections into one (Cin, 3*Cout) weight each.
    w1 = jnp.concatenate([wv1, wk1, wq1], axis=1)
    w2 = jnp.concatenate([wv2, wk2, wq2], axis=1)

    itemsize = jnp.dtype(tensor1.dtype).itemsize
    bytes_per_row = itemsize * (2 * Cin + 6 * Cout)      # HBM bytes moved per row
    tm, Mp = _pick_tile(M, block_m, bytes_per_row, io_budget_bytes=8 * 1024 * 1024)

    if Mp != M:
        # TODO(synk): ragged-tail fallback still pays a whole-array pad copy;
        # only taken when no multiple-of-8 divisor of M near the target exists.
        pad = ((0, Mp - M), (0, 0))
        x1 = jnp.pad(x1, pad)
        x2 = jnp.pad(x2, pad)

    row_spec = pl.BlockSpec((tm, Cin), lambda i: (i, 0))
    w_spec = pl.BlockSpec((Cin, 3 * Cout), lambda i: (0, 0))   # VMEM-resident, never re-DMA'd
    out_spec = pl.BlockSpec((tm, 6 * Cout), lambda i: (i, 0))  # lane-dense fused output

    fused_out = pl.pallas_call(
        functools.partial(_self_attention_kernel, Cout),
        grid=(Mp // tm,),
        in_specs=[row_spec, row_spec, w_spec, w_spec],
        out_specs=out_spec,
        out_shape=jax.ShapeDtypeStruct((Mp, 6 * Cout), tensor1.dtype),
        compiler_params=pltpu.CompilerParams(
            dimension_semantics=("parallel",),
            vmem_limit_bytes=32 * 1024 * 1024,   # lift v5e's 16 MiB scoped default
        ),
    )(x1, x2, w1, w2)

    if Mp != M:
        fused_out = fused_out[:M]

    def _piece(j):
        return fused_out[:, j * Cout:(j + 1) * Cout].reshape(B, T, N, Cout)

    return tuple(_piece(j) for j in range(6))


# ----------------------------------------------------------------------------
# Pure-JAX reference (mirrors the PyTorch forward exactly)
# ----------------------------------------------------------------------------
def self_attention_ref(tensor1, tensor2, wv1, wk1, wq1, wv2, wk2, wq2):
    hi = jax.lax.Precision.HIGHEST
    v1 = jnp.matmul(tensor1, wv1, precision=hi)
    k1 = jnp.matmul(tensor1, wk1, precision=hi)
    q1 = jnp.matmul(tensor1, wq1, precision=hi)
    v2 = jnp.matmul(tensor2, wv2, precision=hi)
    k2 = jnp.matmul(tensor2, wk2, precision=hi)
    q2 = jnp.matmul(tensor2, wq2, precision=hi)

    a11 = jnp.sum(k1 * q1, axis=-1, keepdims=True)
    a12 = jnp.sum(k2 * q1, axis=-1, keepdims=True)
    a1 = jax.nn.softmax(jnp.concatenate([a11, a12], axis=-1), axis=-1)
    a21 = jnp.sum(k1 * q2, axis=-1, keepdims=True)
    a22 = jnp.sum(k2 * q2, axis=-1, keepdims=True)
    a2 = jax.nn.softmax(jnp.concatenate([a21, a22], axis=-1), axis=-1)

    o3 = v1 * a1[..., 0:1]
    o4 = v2 * a1[..., 1:2]
    o5 = v1 * a2[..., 0:1]
    o6 = v2 * a2[..., 1:2]
    return (o3 + o4, o5 + o6, o3, o4, o5, o6)


def _check(shape, weights):
    B, T, N, Cin, Cout = shape
    wv1, wk1, wq1, wv2, wk2, wq2 = weights
    key = jax.random.PRNGKey(0)
    k1_, k2_ = jax.random.split(key)
    t1 = jax.random.normal(k1_, (B, T, N, Cin), dtype=jnp.float32)
    t2 = jax.random.normal(k2_, (B, T, N, Cin), dtype=jnp.float32)

    outs = self_attention(t1, t2, wv1, wk1, wq1, wv2, wk2, wq2)
    outs = jax.block_until_ready(outs)
    refs = self_attention_ref(t1, t2, wv1, wk1, wq1, wv2, wk2, wq2)

    ok = len(outs) == 6
    for o, r in zip(outs, refs):
        if o.shape != (B, T, N, Cout):
            ok = False
        if not jnp.allclose(o, r, atol=1e-4, rtol=1e-4):
            ok = False
    return ok


if __name__ == "__main__":
    Cin, Cout = 16, 32
    kw = jax.random.split(jax.random.PRNGKey(0), 6)
    scale = 1.0 / (Cin ** 0.5)
    weights = tuple(jax.random.normal(k, (Cin, Cout), dtype=jnp.float32) * scale
                    for k in kw)

    ok = _check((2, 4, 16, Cin, Cout), weights)          # M divisible path (no padding)
    ok = ok and _check((1, 3, 15, Cin, Cout), weights)   # ragged M -> padding fallback path

    print("KERNEL_OK" if ok else "KERNEL_MISMATCH")
</pallas_src>

<mosaic_0001>
module attributes {stable_mosaic.version = 11 : i64} {
  func.func @_self_attention_kernel(%arg0: i32, %arg1: memref<64x16xf32, #tpu.memory_space<vmem>>, %arg2: memref<64x16xf32, #tpu.memory_space<vmem>>, %arg3: memref<16x96xf32, #tpu.memory_space<vmem>>, %arg4: memref<16x96xf32, #tpu.memory_space<vmem>>, %arg5: memref<64x192xf32, #tpu.memory_space<vmem>>) attributes {dimension_semantics = [#tpu.dimension_semantics<parallel>], iteration_bounds = array<i64: 2>, scalar_prefetch = 0 : i64, scratch_operands = 0 : i64, tpu.core_type = #tpu.core_type<tc>, window_params = [{transform_indices = @transform_0, window_bounds = array<i64: 64, 16>}, {transform_indices = @transform_1, window_bounds = array<i64: 64, 16>}, {pipeline_mode = #tpu.pipeline_mode<synchronous>, transform_indices = @transform_2, window_bounds = array<i64: 16, 96>}, {pipeline_mode = #tpu.pipeline_mode<synchronous>, transform_indices = @transform_3, window_bounds = array<i64: 16, 96>}, {transform_indices = @transform_4, window_bounds = array<i64: 64, 192>}]} {
    %c0 = arith.constant 0 : index
    %c0_0 = arith.constant 0 : index
    %0 = vector.load %arg1[%c0, %c0_0] : memref<64x16xf32, #tpu.memory_space<vmem>>, vector<64x16xf32>
    %c0_1 = arith.constant 0 : index
    %c0_2 = arith.constant 0 : index
    %1 = vector.load %arg2[%c0_1, %c0_2] : memref<64x16xf32, #tpu.memory_space<vmem>>, vector<64x16xf32>
    %c0_3 = arith.constant 0 : index
    %c0_4 = arith.constant 0 : index
    %2 = vector.load %arg3[%c0_3, %c0_4] : memref<16x96xf32, #tpu.memory_space<vmem>>, vector<16x96xf32>
    %cst = arith.constant dense<0.000000e+00> : vector<64x96xf32>
    %3 = tpu.matmul %0, %2, %cst {dimension_numbers = #tpu.dot_dimension_numbers<[1], [0], [0], [1], [0, 0, 1, 1], [], []>, precision = #tpu.contract_precision<fp32>} : vector<64x16xf32>, vector<16x96xf32>, vector<64x96xf32> -> vector<64x96xf32>
    %c0_5 = arith.constant 0 : index
    %c0_6 = arith.constant 0 : index
    %4 = vector.load %arg4[%c0_5, %c0_6] : memref<16x96xf32, #tpu.memory_space<vmem>>, vector<16x96xf32>
    %cst_7 = arith.constant dense<0.000000e+00> : vector<64x96xf32>
    %5 = tpu.matmul %1, %4, %cst_7 {dimension_numbers = #tpu.dot_dimension_numbers<[1], [0], [0], [1], [0, 0, 1, 1], [], []>, precision = #tpu.contract_precision<fp32>} : vector<64x16xf32>, vector<16x96xf32>, vector<64x96xf32> -> vector<64x96xf32>
    %6 = vector.extract_strided_slice %3 {offsets = [0, 0], sizes = [64, 32], strides = [1, 1]} : vector<64x96xf32> to vector<64x32xf32>
    %7 = vector.extract_strided_slice %3 {offsets = [0, 32], sizes = [64, 32], strides = [1, 1]} : vector<64x96xf32> to vector<64x32xf32>
    %8 = vector.extract_strided_slice %3 {offsets = [0, 64], sizes = [64, 32], strides = [1, 1]} : vector<64x96xf32> to vector<64x32xf32>
    %9 = vector.extract_strided_slice %5 {offsets = [0, 0], sizes = [64, 32], strides = [1, 1]} : vector<64x96xf32> to vector<64x32xf32>
    %10 = vector.extract_strided_slice %5 {offsets = [0, 32], sizes = [64, 32], strides = [1, 1]} : vector<64x96xf32> to vector<64x32xf32>
    %11 = vector.extract_strided_slice %5 {offsets = [0, 64], sizes = [64, 32], strides = [1, 1]} : vector<64x96xf32> to vector<64x32xf32>
    %12 = arith.mulf %7, %8 : vector<64x32xf32>
    %cst_8 = arith.constant dense<0.000000e+00> : vector<64xf32>
    %13 = vector.multi_reduction <add>, %12, %cst_8 [1] : vector<64x32xf32> to vector<64xf32>
    %14 = vector.shape_cast %13 : vector<64xf32> to vector<64x1xf32>
    %15 = arith.mulf %10, %8 : vector<64x32xf32>
    %cst_9 = arith.constant dense<0.000000e+00> : vector<64xf32>
    %16 = vector.multi_reduction <add>, %15, %cst_9 [1] : vector<64x32xf32> to vector<64xf32>
    %17 = vector.shape_cast %16 : vector<64xf32> to vector<64x1xf32>
    %18 = arith.mulf %7, %11 : vector<64x32xf32>
    %cst_10 = arith.constant dense<0.000000e+00> : vector<64xf32>
    %19 = vector.multi_reduction <add>, %18, %cst_10 [1] : vector<64x32xf32> to vector<64xf32>
    %20 = vector.shape_cast %19 : vector<64xf32> to vector<64x1xf32>
    %21 = arith.mulf %10, %11 : vector<64x32xf32>
    %cst_11 = arith.constant dense<0.000000e+00> : vector<64xf32>
    %22 = vector.multi_reduction <add>, %21, %cst_11 [1] : vector<64x32xf32> to vector<64xf32>
    %23 = vector.shape_cast %22 : vector<64xf32> to vector<64x1xf32>
    %24 = arith.maximumf %14, %17 : vector<64x1xf32>
    %25 = arith.subf %14, %24 : vector<64x1xf32>
    %26 = math.exp %25 : vector<64x1xf32>
    %27 = arith.subf %17, %24 : vector<64x1xf32>
    %28 = math.exp %27 : vector<64x1xf32>
    %29 = arith.addf %26, %28 : vector<64x1xf32>
    %cst_12 = arith.constant 1.000000e+00 : f32
    %30 = vector.broadcast %cst_12 : f32 to vector<64x1xf32>
    %31 = arith.divf %30, %29 : vector<64x1xf32>
    %32 = arith.mulf %26, %31 : vector<64x1xf32>
    %33 = arith.mulf %28, %31 : vector<64x1xf32>
    %34 = arith.maximumf %20, %23 : vector<64x1xf32>
    %35 = arith.subf %20, %34 : vector<64x1xf32>
    %36 = math.exp %35 : vector<64x1xf32>
    %37 = arith.subf %23, %34 : vector<64x1xf32>
    %38 = math.exp %37 : vector<64x1xf32>
    %39 = arith.addf %36, %38 : vector<64x1xf32>
    %cst_13 = arith.constant 1.000000e+00 : f32
    %40 = vector.broadcast %cst_13 : f32 to vector<64x1xf32>
    %41 = arith.divf %40, %39 : vector<64x1xf32>
    %42 = arith.mulf %36, %41 : vector<64x1xf32>
    %43 = arith.mulf %38, %41 : vector<64x1xf32>
    %44 = vector.broadcast %32 : vector<64x1xf32> to vector<64x32xf32>
    %45 = arith.mulf %6, %44 : vector<64x32xf32>
    %46 = vector.broadcast %33 : vector<64x1xf32> to vector<64x32xf32>
    %47 = arith.mulf %9, %46 : vector<64x32xf32>
    %48 = vector.broadcast %42 : vector<64x1xf32> to vector<64x32xf32>
    %49 = arith.mulf %6, %48 : vector<64x32xf32>
    %50 = vector.broadcast %43 : vector<64x1xf32> to vector<64x32xf32>
    %51 = arith.mulf %9, %50 : vector<64x32xf32>
    %52 = arith.addf %45, %47 : vector<64x32xf32>
    %53 = arith.addf %49, %51 : vector<64x32xf32>
    %54 = tpu.concatenate %52, %53, %45, %47, %49, %51 in 1 : vector<64x32xf32>, vector<64x32xf32>, vector<64x32xf32>, vector<64x32xf32>, vector<64x32xf32>, vector<64x32xf32> -> vector<64x192xf32>
    %c0_14 = arith.constant 0 : index
    %c0_15 = arith.constant 0 : index
    %55 = vector.load %arg5[%c0_14, %c0_15] : memref<64x192xf32, #tpu.memory_space<vmem>>, vector<64x192xf32>
    tpu.vector_store %arg5[%c0_14, %c0_15], %54 {strides = array<i32>} : memref<64x192xf32, #tpu.memory_space<vmem>>, vector<64x192xf32>,
    return
  }
  func.func @transform_0(%arg0: i32) -> (i32, i32) {
    %c0_i32 = arith.constant 0 : i32
    %c0_i32_0 = arith.constant 0 : i32
    return %arg0, %c0_i32 : i32, i32
  }
  func.func @transform_1(%arg0: i32) -> (i32, i32) {
    %c0_i32 = arith.constant 0 : i32
    %c0_i32_0 = arith.constant 0 : i32
    return %arg0, %c0_i32 : i32, i32
  }
  func.func @transform_2(%arg0: i32) -> (i32, i32) {
    %c0_i32 = arith.constant 0 : i32
    %c0_i32_0 = arith.constant 0 : i32
    %c0_i32_1 = arith.constant 0 : i32
    return %c0_i32, %c0_i32_0 : i32, i32
  }
  func.func @transform_3(%arg0: i32) -> (i32, i32) {
    %c0_i32 = arith.constant 0 : i32
    %c0_i32_0 = arith.constant 0 : i32
    %c0_i32_1 = arith.constant 0 : i32
    return %c0_i32, %c0_i32_0 : i32, i32
  }
  func.func @transform_4(%arg0: i32) -> (i32, i32) {
    %c0_i32 = arith.constant 0 : i32
    %c0_i32_0 = arith.constant 0 : i32
    return %arg0, %c0_i32 : i32, i32
  }
}

</mosaic_0001>

<llo_original>
// kernel: self_attention.1
$region0: #{self_attention.1}
  #allocation0 [shape = 'u32[]', space=smem, size = 0x4, offset = 0x4, fixed_abs, tag = 'smem constant byte address 0x4 - core index']
  #allocation1 [shape = 'u32[72,128]{1,0:T(1,128)}', space=vmem, size = 0x9000, scoped, tag = 'internal scratch']
  %s0 = inlined_call_operand.hbm [shape: f32[128,16], index: 0, kind: input, shape index: {}]
  %s1 = inlined_call_operand.hbm [shape: f32[128,16], index: 1, kind: input, shape index: {}]
  %s2 = inlined_call_operand.vmem [shape: f32[16,96], index: 2, kind: input, shape index: {}]
  %s3 = inlined_call_operand.vmem [shape: f32[16,96], index: 3, kind: input, shape index: {}]
  %s4 = inlined_call_operand.vmem [shape: f32[128,192], index: 4, kind: output, shape index: {}]
  %s5 = sld [smem:[#allocation0]]
  $region57: #{self_attention.1} parent=0
    _
  %s7 = ssub.s32 1, %s5
  %s8 = scalar_select 0, %s7, %s5
  $region1: #{self_attention.1} parent=0
    #allocation2 [shape = 'u8[65536]{0}', space=vmem, size = 0x10000, scoped, tag = 'input window, operand 0']
    #allocation3 [shape = 's32[2]{0}', space=sflag, size = 0x8, scoped, tag = 'scoped memory for self_attention.1']
    #allocation4 [shape = 'u8[65536]{0}', space=vmem, size = 0x10000, scoped, tag = 'input window, operand 1']
    #allocation5 [shape = 's32[2]{0}', space=sflag, size = 0x8, scoped, tag = 'scoped memory for self_attention.1']
    %9 = vsyncpa [#allocation3], 0
    %s10 = scalar_lea.sflag [#allocation3], 1
    %11 = vsyncpa %s10, 0
    %12 = vsyncpa [#allocation5], 0
    %s13 = scalar_lea.sflag [#allocation5], 1
    %14 = vsyncpa %s13, 0
    loop: start=0, step=1, limit=4
    $region2: #{self_attention.1} parent=1 // loop_pre_header
      _
    $region3: #{self_attention.1} parent=1 // loop_header
      %s16 = sphi 0, %s20
      %p17 = scmp.ge.s32.totalorder %s16, 4
      %s26 = sphi 0, %s28
      %s29 = sphi 0, %s26
      %s30 = sphi 0, %s29
      %s46 = sphi 0, %s30
      %s52 = sphi 0, %s54
      %s55 = sphi 0, %s52
      %s56 = sphi 0, %s55
      %s72 = sphi 0, %s56
      %s76 = sphi 0, %s76
      %s78 = sphi 0, %s76
      %s79 = sphi 0, %s78
      %s93 = sphi 0, %s79
      %s97 = sphi 0, %s97
      %s99 = sphi 0, %s97
      %s100 = sphi 0, %s99
      %s114 = sphi 0, %s100
      %s120 = sphi 0, %s122
      %s123 = sphi 0, %s120
      %s124 = sphi 0, %s123
      %s140 = sphi 0, %s124
    $region4: #{self_attention.1} parent=1 // loop_header_branch
      %19 = sbr.rel (%p17) target = $region8
    $region5: #{self_attention.1} parent=1 // loop_body
      %s21 = ssub.s32 %s16, 1
      %s22 = ssub.s32 %s16, 2
      %s23 = sadd.s32 %s16, 1
      %s24 = ssub.s32 %s16, %s23
      %p25 = scmp.eq.s32.totalorder %s24, 0
      %s27 = sadd.s32 %s26, 1
      %s28 = scalar_select %p25, %s26, %s27
      %p31 = pneg %p25
      %p32 = scmp.eq.s32.totalorder %s16, 1
      %p33 = por %p31, %p32
      %p34 = scmp.ne.s32.totalorder %s26, %s29
      %p35 = scmp.eq.s32.totalorder %s16, 0
      %p36 = por %p34, %p35
      %p37 = scmp.ne.s32.totalorder %s26, %s29
      %p38 = scmp.eq.s32.totalorder %s21, 1
      %p39 = por %p37, %p38
      %p40 = scmp.ne.s32.totalorder %s29, %s30
      %p41 = scmp.eq.s32.totalorder %s21, 0
      %p42 = por %p40, %p41
      %p43 = scmp.ne.s32.totalorder %s29, %s30
      %p44 = scmp.eq.s32.totalorder %s22, 1
      %p45 = por %p43, %p44
      %p47 = scmp.ne.s32.totalorder %s30, %s46
      %p48 = scmp.eq.s32.totalorder %s22, 0
      %p49 = por %p47, %p48
      %s50 = ssub.s32 %s16, %s23
      %p51 = scmp.eq.s32.totalorder %s50, 0
      %s53 = sadd.s32 %s52, 1
      %s54 = scalar_select %p51, %s52, %s53
      %p57 = pneg %p51
      %p58 = scmp.eq.s32.totalorder %s16, 1
      %p59 = por %p57, %p58
      %p60 = scmp.ne.s32.totalorder %s52, %s55
      %p61 = scmp.eq.s32.totalorder %s16, 0
      %p62 = por %p60, %p61
      %p63 = scmp.ne.s32.totalorder %s52, %s55
      %p64 = scmp.eq.s32.totalorder %s21, 1
      %p65 = por %p63, %p64
      %p66 = scmp.ne.s32.totalorder %s55, %s56
      %p67 = scmp.eq.s32.totalorder %s21, 0
      %p68 = por %p66, %p67
      %p69 = scmp.ne.s32.totalorder %s55, %s56
      %p70 = scmp.eq.s32.totalorder %s22, 1
      %p71 = por %p69, %p70
      %p73 = scmp.ne.s32.totalorder %s56, %s72
      %p74 = scmp.eq.s32.totalorder %s22, 0
      %p75 = por %p73, %p74
      %s77 = sadd.s32 %s76, 1
      %p80 = scmp.eq.s32.totalorder %s16, 1
      %p81 = scmp.ne.s32.totalorder %s76, %s78
      %p82 = scmp.eq.s32.totalorder %s16, 0
      %p83 = por %p81, %p82
      %p84 = scmp.ne.s32.totalorder %s76, %s78
      %p85 = scmp.eq.s32.totalorder %s21, 1
      %p86 = por %p84, %p85
      %p87 = scmp.ne.s32.totalorder %s78, %s79
      %p88 = scmp.eq.s32.totalorder %s21, 0
      %p89 = por %p87, %p88
      %p90 = scmp.ne.s32.totalorder %s78, %s79
      %p91 = scmp.eq.s32.totalorder %s22, 1
      %p92 = por %p90, %p91
      %p94 = scmp.ne.s32.totalorder %s79, %s93
      %p95 = scmp.eq.s32.totalorder %s22, 0
      %p96 = por %p94, %p95
      %s98 = sadd.s32 %s97, 1
      %p101 = scmp.eq.s32.totalorder %s16, 1
      %p102 = scmp.ne.s32.totalorder %s97, %s99
      %p103 = scmp.eq.s32.totalorder %s16, 0
      %p104 = por %p102, %p103
      %p105 = scmp.ne.s32.totalorder %s97, %s99
      %p106 = scmp.eq.s32.totalorder %s21, 1
      %p107 = por %p105, %p106
      %p108 = scmp.ne.s32.totalorder %s99, %s100
      %p109 = scmp.eq.s32.totalorder %s21, 0
      %p110 = por %p108, %p109
      %p111 = scmp.ne.s32.totalorder %s99, %s100
      %p112 = scmp.eq.s32.totalorder %s22, 1
      %p113 = por %p111, %p112
      %p115 = scmp.ne.s32.totalorder %s100, %s114
      %p116 = scmp.eq.s32.totalorder %s22, 0
      %p117 = por %p115, %p116
      %s118 = ssub.s32 %s16, %s23
      %p119 = scmp.eq.s32.totalorder %s118, 0
      %s121 = sadd.s32 %s120, 1
      %s122 = scalar_select %p119, %s120, %s121
      %p125 = pneg %p119
      %p126 = scmp.eq.s32.totalorder %s16, 1
      %p127 = por %p125, %p126
      %p128 = scmp.ne.s32.totalorder %s120, %s123
      %p129 = scmp.eq.s32.totalorder %s16, 0
      %p130 = por %p128, %p129
      %p131 = scmp.ne.s32.totalorder %s120, %s123
      %p132 = scmp.eq.s32.totalorder %s21, 1
      %p133 = por %p131, %p132
      %p134 = scmp.ne.s32.totalorder %s123, %s124
      %p135 = scmp.eq.s32.totalorder %s21, 0
      %p136 = por %p134, %p135
      %p137 = scmp.ne.s32.totalorder %s123, %s124
      %p138 = scmp.eq.s32.totalorder %s22, 1
      %p139 = por %p137, %p138
      %p141 = scmp.ne.s32.totalorder %s124, %s140
      %p142 = scmp.eq.s32.totalorder %s22, 0
      %p143 = por %p141, %p142
      %p144 = scmp.le.s32.totalorder 1, %s16
      %p145 = scmp.lt.s32.totalorder %s16, 3
      %p146 = pnand %p144, %p145
      %p147 = pneg %p146
      // Predicated region
      $region9: #{self_attention.1} parent=5 // pred_check
        _
      $region10: #{self_attention.1} parent=5 // pred_check_branch
        %149 = sbr.rel (%p146) target = $region12
      $region11: #{self_attention.1} parent=5 // pred_region
        %s150 = ssub.s32 %s16, 1
        // Predicated region
        $region13: #{self_attention.1} parent=11 // pred_check
          %p151 = pneg %p89
        $region14: #{self_attention.1} parent=11 // pred_check_branch
          %153 = sbr.rel (%p151) target = $region16
        $region15: #{self_attention.1} parent=11 // pred_region
          _
        $region16: #{self_attention.1} parent=11 // pred_fallthru
          _
        // Predicated region
        $region17: #{self_attention.1} parent=11 // pred_check
          %p154 = pneg %p110
        $region18: #{self_attention.1} parent=11 // pred_check_branch
          %156 = sbr.rel (%p154) target = $region20
        $region19: #{self_attention.1} parent=11 // pred_region
          _
        $region20: #{self_attention.1} parent=11 // pred_fallthru
          _
      $region12: #{self_attention.1} parent=5 // pred_fallthru
        _
      %p157 = scmp.lt.s32.totalorder %s16, 2
      // Predicated region
      $region21: #{self_attention.1} parent=5 // pred_check
        %p158 = pneg %p157
      $region22: #{self_attention.1} parent=5 // pred_check_branch
        %160 = sbr.rel (%p158) target = $region24
      $region23: #{self_attention.1} parent=5 // pred_region
        // Predicated region
        $region25: #{self_attention.1} parent=23 // pred_check
          %p161 = pneg %p36
        $region26: #{self_attention.1} parent=23 // pred_check_branch
          %163 = sbr.rel (%p161) target = $region28
        $region27: #{self_attention.1} parent=23 // pred_region
          %s164 = sand.u32 %s26, 1
          %s165 = scalar_lea.sflag [#allocation3], %s164
          %s166 = sand.u32 %s26, 1
          %s167 = smul.addr %s166, 64
          %s168 = scalar_lea.vmem [#allocation2], %s167
          %s169 = smul.u32 8, %s16
          %171 = vsyncadd %s165, 0
          %s172 = smul.addr %s169, 8
          %s173 = scalar_lea.hbm %s0, %s172
          %s174 = sshll.u32 %s173, 4
          %s175 = int_to_ptr.hbm [resolvable:$true] %s174
          %s176 = sshll.u32 %s168, 4
          %s177 = int_to_ptr.vmem [resolvable:$true] %s176
          %182 = dma.hbm_to_vmem [thread:$0]  %s175, 1024, %s177, %s165, 128, 128, 8
        $region28: #{self_attention.1} parent=23 // pred_fallthru
          _
        // Predicated region
        $region29: #{self_attention.1} parent=23 // pred_check
          %p183 = pneg %p62
        $region30: #{self_attention.1} parent=23 // pred_check_branch
          %185 = sbr.rel (%p183) target = $region32
        $region31: #{self_attention.1} parent=23 // pred_region
          %s186 = sand.u32 %s52, 1
          %s187 = scalar_lea.sflag [#allocation5], %s186
          %s188 = sand.u32 %s52, 1
          %s189 = smul.addr %s188, 64
          %s190 = scalar_lea.vmem [#allocation4], %s189
          %s191 = smul.u32 8, %s16
          %193 = vsyncadd %s187, 0
          %s194 = smul.addr %s191, 8
          %s195 = scalar_lea.hbm %s1, %s194
          %s196 = sshll.u32 %s195, 4
          %s197 = int_to_ptr.hbm [resolvable:$true] %s196
          %s198 = sshll.u32 %s190, 4
          %s199 = int_to_ptr.vmem [resolvable:$true] %s198
          %204 = dma.hbm_to_vmem [thread:$0]  %s197, 1024, %s199, %s187, 128, 128, 8
        $region32: #{self_attention.1} parent=23 // pred_fallthru
          _
      $region24: #{self_attention.1} parent=5 // pred_fallthru
        _
      %p205 = scmp.le.s32.totalorder 1, %s16
      %p206 = scmp.lt.s32.totalorder %s16, 3
      %p207 = pnand %p205, %p206
      %p208 = pneg %p207
      // Predicated region
      $region33: #{self_attention.1} parent=5 // pred_check
        _
      $region34: #{self_attention.1} parent=5 // pred_check_branch
        %210 = sbr.rel (%p207) target = $region36
      $region35: #{self_attention.1} parent=5 // pred_region
        %s211 = ssub.s32 %s16, 1
        %s212 = sand.u32 %s29, 1
        %s213 = scalar_lea.sflag [#allocation3], %s212
        %s214 = sand.u32 %s29, 1
        %s215 = smul.addr %s214, 64
        %s216 = scalar_lea.vmem [#allocation2], %s215
        // Predicated region
        $region37: #{self_attention.1} parent=35 // pred_check
          %p217 = pneg %p42
        $region38: #{self_attention.1} parent=35 // pred_check_branch
          %219 = sbr.rel (%p217) target = $region40
        $region39: #{self_attention.1} parent=35 // pred_region
          %221 = dma.done %s213, 1024
        $region40: #{self_attention.1} parent=35 // pred_fallthru
          _
        %s222 = sand.u32 %s55, 1
        %s223 = scalar_lea.sflag [#allocation5], %s222
        %s224 = sand.u32 %s55, 1
        %s225 = smul.addr %s224, 64
        %s226 = scalar_lea.vmem [#allocation4], %s225
        // Predicated region
        $region41: #{self_attention.1} parent=35 // pred_check
          %p227 = pneg %p68
        $region42: #{self_attention.1} parent=35 // pred_check_branch
          %229 = sbr.rel (%p227) target = $region44
        $region43: #{self_attention.1} parent=35 // pred_region
          %231 = dma.done %s223, 1024
        $region44: #{self_attention.1} parent=35 // pred_fallthru
          _
        %s232 = sand.u32 %s29, 1
        %s233 = scalar_lea.sflag [#allocation3], %s232
        %s234 = sand.u32 %s29, 1
        %s235 = smul.addr %s234, 64
        %s236 = scalar_lea.vmem [#allocation2], %s235
        %p237 = pneg %p42
        %p238 = pneg %p39
        %s239 = sand.u32 %s55, 1
        %s240 = scalar_lea.sflag [#allocation5], %s239
        %s241 = sand.u32 %s55, 1
        %s242 = smul.addr %s241, 64
        %s243 = scalar_lea.vmem [#allocation4], %s242
        %p244 = pneg %p68
        %p245 = pneg %p65
        %p246 = pneg %p89
        %p247 = pneg %p86
        %p248 = pneg %p110
        %p249 = pneg %p107
        %p250 = pneg %p136
        %p251 = pneg %p133
        %s252 = smul.u32 8, %s21
        %p253 = scmp.lt.s32.totalorder %s252, 15
        %s254 = scalar_select %p253, %s252, 15
        %s255 = smul.addr %s254, 2
        %s256 = smul.addr %s255, 8
        %s257 = scalar_lea.vmem %s4, %s256
        %s258 = smul.u32 8, %s21
        %s259 = smul.u32 8, %s21
        %s260 = smul.u32 8, %s21
        %p261 = scmp.lt.s32.totalorder %s260, 15
        %s262 = scalar_select %p261, %s260, 15
        %s263 = smul.addr %s262, 2
        %s264 = smul.addr %s263, 8
        %s265 = scalar_lea.vmem %s4, %s264
        %s266 = smul.u32 8, %s21
        %v267 = vld [vmem:[%s216] sm:$0xff]
        %v268 = vld [vmem:[%s216 + $0x8] sm:$0xff]
        %v269 = vld [vmem:[%s216 + $0x10] sm:$0xff]
        %v270 = vld [vmem:[%s216 + $0x18] sm:$0xff]
        %v271 = vld [vmem:[%s216 + $0x20] sm:$0xff]
        %v272 = vld [vmem:[%s216 + $0x28] sm:$0xff]
        %v273 = vld [vmem:[%s216 + $0x30] sm:$0xff]
        %v274 = vld [vmem:[%s216 + $0x38] sm:$0xff]
        %v275 = vld [vmem:[%s226] sm:$0xff]
        %v276 = vld [vmem:[%s226 + $0x8] sm:$0xff]
        %v277 = vld [vmem:[%s226 + $0x10] sm:$0xff]
        %v278 = vld [vmem:[%s226 + $0x18] sm:$0xff]
        %v279 = vld [vmem:[%s226 + $0x20] sm:$0xff]
        %v280 = vld [vmem:[%s226 + $0x28] sm:$0xff]
        %v281 = vld [vmem:[%s226 + $0x30] sm:$0xff]
        %v282 = vld [vmem:[%s226 + $0x38] sm:$0xff]
        %v283 = vld [vmem:[%s2] sm:$0xff]
        %v284 = vld [vmem:[%s2 + $0x8] sm:$0xff]
        %vm285 = vcmask 130048
        %v287 = vsel %vm285, %v267, 0
        %v290 = vsel %vm285, %v268, 0
        %v293 = vsel %vm285, %v269, 0
        %v296 = vsel %vm285, %v270, 0
        %v299 = vsel %vm285, %v271, 0
        %v302 = vsel %vm285, %v272, 0
        %v305 = vsel %vm285, %v273, 0
        %v308 = vsel %vm285, %v274, 0
        %310 = vmatpush.msra.mxu0 0.0
        %311 = vmatpush.msra.mxu0 0.0
        %312 = vmatpush.msra.mxu0 0.0
        %313 = vmatpush.msra.mxu0 0.0
        %314 = vmatpush.msra.mxu0 0.0
        %315 = vmatpush.msra.mxu0 0.0
        %316 = vmatpush.msra.mxu0 0.0
        %317 = vmatpush.msra.mxu0 0.0
        %318 = vmatpush.msra.mxu0 0.0
        %319 = vmatpush.msra.mxu0 0.0
        %320 = vmatpush.msra.mxu0 0.0
        %321 = vmatpush.msra.mxu0 0.0
        %322 = vmatpush.msra.mxu0 0.0
        %323 = vmatpush.msra.mxu0 0.0
        %v324 = vand.u32 %v284, 4294901760
        %325 = vmatpush.msra.mxu0 %v324
        %v326 = vand.u32 %v283, 4294901760
        %327 = vmatpush.msra.mxu0 %v326
        %v328 = vand.u32 %v287, 4294901760
        %v329 = vsub.f32 %v287, %v328
        %v330 = vand.u32 %v329, 4294901760
        %v331 = vsub.f32 %v329, %v330
        %v332 = vand.u32 %v331, 4294901760
        %333 = vmatmul.f32.gmra.mxu0 %v332
        %v334 = vpop.f32.mrf.mxu0
        %v335 = vadd.f32 0.0, %v334
        %v336 = vand.u32 %v290, 4294901760
        %v337 = vsub.f32 %v290, %v336
        %v338 = vand.u32 %v337, 4294901760
        %v339 = vsub.f32 %v337, %v338
        %v340 = vand.u32 %v339, 4294901760
        %341 = vmatmul.f32.gmra.mxu0 %v340
        %v342 = vpop.f32.mrf.mxu0
        %v343 = vadd.f32 0.0, %v342
        %v344 = vand.u32 %v293, 4294901760
        %v345 = vsub.f32 %v293, %v344
        %v346 = vand.u32 %v345, 4294901760
        %v347 = vsub.f32 %v345, %v346
        %v348 = vand.u32 %v347, 4294901760
        %349 = vmatmul.f32.gmra.mxu0 %v348
        %v350 = vpop.f32.mrf.mxu0
        %v351 = vadd.f32 0.0, %v350
        %v352 = vand.u32 %v296, 4294901760
        %v353 = vsub.f32 %v296, %v352
        %v354 = vand.u32 %v353, 4294901760
        %v355 = vsub.f32 %v353, %v354
        %v356 = vand.u32 %v355, 4294901760
        %357 = vmatmul.f32.gmra.mxu0 %v356
        %v358 = vpop.f32.mrf.mxu0
        %v359 = vadd.f32 0.0, %v358
        %v360 = vand.u32 %v299, 4294901760
        %v361 = vsub.f32 %v299, %v360
        %v362 = vand.u32 %v361, 4294901760
        %v363 = vsub.f32 %v361, %v362
        %v364 = vand.u32 %v363, 4294901760
        %365 = vmatmul.f32.gmra.mxu0 %v364
        %v366 = vpop.f32.mrf.mxu0
        %v367 = vadd.f32 0.0, %v366
        %v368 = vand.u32 %v302, 4294901760
        %v369 = vsub.f32 %v302, %v368
        %v370 = vand.u32 %v369, 4294901760
        %v371 = vsub.f32 %v369, %v370
        %v372 = vand.u32 %v371, 4294901760
        %373 = vmatmul.f32.gmra.mxu0 %v372
        %v374 = vpop.f32.mrf.mxu0
        %v375 = vadd.f32 0.0, %v374
        %v376 = vand.u32 %v305, 4294901760
        %v377 = vsub.f32 %v305, %v376
        %v378 = vand.u32 %v377, 4294901760
        %v379 = vsub.f32 %v377, %v378
        %v380 = vand.u32 %v379, 4294901760
        %381 = vmatmul.f32.gmra.mxu0 %v380
        %v382 = vpop.f32.mrf.mxu0
        %v383 = vadd.f32 0.0, %v382
        %v384 = vand.u32 %v308, 4294901760
        %v385 = vsub.f32 %v308, %v384
        %v386 = vand.u32 %v385, 4294901760
        %v387 = vsub.f32 %v385, %v386
        %v388 = vand.u32 %v387, 4294901760
        %389 = vmatmul.f32.gmra.mxu0 %v388
        %v390 = vpop.f32.mrf.mxu0
        %v391 = vadd.f32 0.0, %v390
        %392 = vdwg.mxu0
        %393 = vmatpush.msra.mxu0 0.0
        %394 = vmatpush.msra.mxu0 0.0
        %395 = vmatpush.msra.mxu0 0.0
        %396 = vmatpush.msra.mxu0 0.0
        %397 = vmatpush.msra.mxu0 0.0
        %398 = vmatpush.msra.mxu0 0.0
        %399 = vmatpush.msra.mxu0 0.0
        %400 = vmatpush.msra.mxu0 0.0
        %401 = vmatpush.msra.mxu0 0.0
        %402 = vmatpush.msra.mxu0 0.0
        %403 = vmatpush.msra.mxu0 0.0
        %404 = vmatpush.msra.mxu0 0.0
        %405 = vmatpush.msra.mxu0 0.0
        %406 = vmatpush.msra.mxu0 0.0
        %v407 = vand.u32 %v284, 4294901760
        %v408 = vsub.f32 %v284, %v407
        %v409 = vand.u32 %v408, 4294901760
        %v410 = vsub.f32 %v408, %v409
        %v411 = vand.u32 %v410, 4294901760
        %412 = vmatpush.msra.mxu0 %v411
        %v413 = vand.u32 %v283, 4294901760
        %v414 = vsub.f32 %v283, %v413
        %v415 = vand.u32 %v414, 4294901760
        %v416 = vsub.f32 %v414, %v415
        %v417 = vand.u32 %v416, 4294901760
        %418 = vmatpush.msra.mxu0 %v417
        %v419 = vand.u32 %v287, 4294901760
        %420 = vmatmul.f32.gmra.mxu0 %v419
        %v421 = vpop.f32.mrf.mxu0
        %v422 = vadd.f32 %v335, %v421
        %v423 = vand.u32 %v290, 4294901760
        %424 = vmatmul.f32.gmra.mxu0 %v423
        %v425 = vpop.f32.mrf.mxu0
        %v426 = vadd.f32 %v343, %v425
        %v427 = vand.u32 %v293, 4294901760
        %428 = vmatmul.f32.gmra.mxu0 %v427
        %v429 = vpop.f32.mrf.mxu0
        %v430 = vadd.f32 %v351, %v429
        %v431 = vand.u32 %v296, 4294901760
        %432 = vmatmul.f32.gmra.mxu0 %v431
        %v433 = vpop.f32.mrf.mxu0
        %v434 = vadd.f32 %v359, %v433
        %v435 = vand.u32 %v299, 4294901760
        %436 = vmatmul.f32.gmra.mxu0 %v435
        %v437 = vpop.f32.mrf.mxu0
        %v438 = vadd.f32 %v367, %v437
        %v439 = vand.u32 %v302, 4294901760
        %440 = vmatmul.f32.gmra.mxu0 %v439
        %v441 = vpop.f32.mrf.mxu0
        %v442 = vadd.f32 %v375, %v441
        %v443 = vand.u32 %v305, 4294901760
        %444 = vmatmul.f32.gmra.mxu0 %v443
        %v445 = vpop.f32.mrf.mxu0
        %v446 = vadd.f32 %v383, %v445
        %v447 = vand.u32 %v308, 4294901760
        %448 = vmatmul.f32.gmra.mxu0 %v447
        %v449 = vpop.f32.mrf.mxu0
        %v450 = vadd.f32 %v391, %v449
        %451 = vdwg.mxu0
        %452 = vmatpush.msra.mxu0 0.0
        %453 = vmatpush.msra.mxu0 0.0
        %454 = vmatpush.msra.mxu0 0.0
        %455 = vmatpush.msra.mxu0 0.0
        %456 = vmatpush.msra.mxu0 0.0
        %457 = vmatpush.msra.mxu0 0.0
        %458 = vmatpush.msra.mxu0 0.0
        %459 = vmatpush.msra.mxu0 0.0
        %460 = vmatpush.msra.mxu0 0.0
        %461 = vmatpush.msra.mxu0 0.0
        %462 = vmatpush.msra.mxu0 0.0
        %463 = vmatpush.msra.mxu0 0.0
        %464 = vmatpush.msra.mxu0 0.0
        %465 = vmatpush.msra.mxu0 0.0
        %v466 = vand.u32 %v284, 4294901760
        %v467 = vsub.f32 %v284, %v466
        %468 = vmatpush.msra.mxu0 %v467
        %v469 = vand.u32 %v283, 4294901760
        %v470 = vsub.f32 %v283, %v469
        %471 = vmatpush.msra.mxu0 %v470
        %v472 = vand.u32 %v287, 4294901760
        %v473 = vsub.f32 %v287, %v472
        %474 = vmatmul.f32.gmra.mxu0 %v473
        %v475 = vpop.f32.mrf.mxu0
        %v476 = vadd.f32 %v422, %v475
        %v477 = vand.u32 %v290, 4294901760
        %v478 = vsub.f32 %v290, %v477
        %479 = vmatmul.f32.gmra.mxu0 %v478
        %v480 = vpop.f32.mrf.mxu0
        %v481 = vadd.f32 %v426, %v480
        %v482 = vand.u32 %v293, 4294901760
        %v483 = vsub.f32 %v293, %v482
        %484 = vmatmul.f32.gmra.mxu0 %v483
        %v485 = vpop.f32.mrf.mxu0
        %v486 = vadd.f32 %v430, %v485
        %v487 = vand.u32 %v296, 4294901760
        %v488 = vsub.f32 %v296, %v487
        %489 = vmatmul.f32.gmra.mxu0 %v488
        %v490 = vpop.f32.mrf.mxu0
        %v491 = vadd.f32 %v434, %v490
        %v492 = vand.u32 %v299, 4294901760
        %v493 = vsub.f32 %v299, %v492
        %494 = vmatmul.f32.gmra.mxu0 %v493
        %v495 = vpop.f32.mrf.mxu0
        %v496 = vadd.f32 %v438, %v495
        %v497 = vand.u32 %v302, 4294901760
        %v498 = vsub.f32 %v302, %v497
        %499 = vmatmul.f32.gmra.mxu0 %v498
        %v500 = vpop.f32.mrf.mxu0
        %v501 = vadd.f32 %v442, %v500
        %v502 = vand.u32 %v305, 4294901760
        %v503 = vsub.f32 %v305, %v502
        %504 = vmatmul.f32.gmra.mxu0 %v503
        %v505 = vpop.f32.mrf.mxu0
        %v506 = vadd.f32 %v446, %v505
        %v507 = vand.u32 %v308, 4294901760
        %v508 = vsub.f32 %v308, %v507
        %509 = vmatmul.f32.gmra.mxu0 %v508
        %v510 = vpop.f32.mrf.mxu0
        %v511 = vadd.f32 %v450, %v510
        %512 = vdwg.mxu0
        %513 = vmatpush.msra.mxu0 0.0
        %514 = vmatpush.msra.mxu0 0.0
        %515 = vmatpush.msra.mxu0 0.0
        %516 = vmatpush.msra.mxu0 0.0
        %517 = vmatpush.msra.mxu0 0.0
        %518 = vmatpush.msra.mxu0 0.0
        %519 = vmatpush.msra.mxu0 0.0
        %520 = vmatpush.msra.mxu0 0.0
        %521 = vmatpush.msra.mxu0 0.0
        %522 = vmatpush.msra.mxu0 0.0
        %523 = vmatpush.msra.mxu0 0.0
        %524 = vmatpush.msra.mxu0 0.0
        %525 = vmatpush.msra.mxu0 0.0
        %526 = vmatpush.msra.mxu0 0.0
        %v527 = vand.u32 %v284, 4294901760
        %528 = vmatpush.msra.mxu0 %v527
        %v529 = vand.u32 %v283, 4294901760
        %530 = vmatpush.msra.mxu0 %v529
        %v531 = vand.u32 %v287, 4294901760
        %v532 = vsub.f32 %v287, %v531
        %v533 = vand.u32 %v532, 4294901760
        %534 = vmatmul.f32.gmra.mxu0 %v533
        %v535 = vpop.f32.mrf.mxu0
        %v536 = vadd.f32 %v476, %v535
        %v537 = vand.u32 %v290, 4294901760
        %v538 = vsub.f32 %v290, %v537
        %v539 = vand.u32 %v538, 4294901760
        %540 = vmatmul.f32.gmra.mxu0 %v539
        %v541 = vpop.f32.mrf.mxu0
        %v542 = vadd.f32 %v481, %v541
        %v543 = vand.u32 %v293, 4294901760
        %v544 = vsub.f32 %v293, %v543
        %v545 = vand.u32 %v544, 4294901760
        %546 = vmatmul.f32.gmra.mxu0 %v545
        %v547 = vpop.f32.mrf.mxu0
        %v548 = vadd.f32 %v486, %v547
        %v549 = vand.u32 %v296, 4294901760
        %v550 = vsub.f32 %v296, %v549
        %v551 = vand.u32 %v550, 4294901760
        %552 = vmatmul.f32.gmra.mxu0 %v551
        %v553 = vpop.f32.mrf.mxu0
        %v554 = vadd.f32 %v491, %v553
        %v555 = vand.u32 %v299, 4294901760
        %v556 = vsub.f32 %v299, %v555
        %v557 = vand.u32 %v556, 4294901760
        %558 = vmatmul.f32.gmra.mxu0 %v557
        %v559 = vpop.f32.mrf.mxu0
        %v560 = vadd.f32 %v496, %v559
        %v561 = vand.u32 %v302, 4294901760
        %v562 = vsub.f32 %v302, %v561
        %v563 = vand.u32 %v562, 4294901760
        %564 = vmatmul.f32.gmra.mxu0 %v563
        %v565 = vpop.f32.mrf.mxu0
        %v566 = vadd.f32 %v501, %v565
        %v567 = vand.u32 %v305, 4294901760
        %v568 = vsub.f32 %v305, %v567
        %v569 = vand.u32 %v568, 4294901760
        %570 = vmatmul.f32.gmra.mxu0 %v569
        %v571 = vpop.f32.mrf.mxu0
        %v572 = vadd.f32 %v506, %v571
        %v573 = vand.u32 %v308, 4294901760
        %v574 = vsub.f32 %v308, %v573
        %v575 = vand.u32 %v574, 4294901760
        %576 = vmatmul.f32.gmra.mxu0 %v575
        %v577 = vpop.f32.mrf.mxu0
        %v578 = vadd.f32 %v511, %v577
        %579 = vdwg.mxu0
        %580 = vmatpush.msra.mxu0 0.0
        %581 = vmatpush.msra.mxu0 0.0
        %582 = vmatpush.msra.mxu0 0.0
        %583 = vmatpush.msra.mxu0 0.0
        %584 = vmatpush.msra.mxu0 0.0
        %585 = vmatpush.msra.mxu0 0.0
        %586 = vmatpush.msra.mxu0 0.0
        %587 = vmatpush.msra.mxu0 0.0
        %588 = vmatpush.msra.mxu0 0.0
        %589 = vmatpush.msra.mxu0 0.0
        %590 = vmatpush.msra.mxu0 0.0
        %591 = vmatpush.msra.mxu0 0.0
        %592 = vmatpush.msra.mxu0 0.0
        %593 = vmatpush.msra.mxu0 0.0
        %v594 = vand.u32 %v284, 4294901760
        %v595 = vsub.f32 %v284, %v594
        %v596 = vand.u32 %v595, 4294901760
        %597 = vmatpush.msra.mxu0 %v596
        %v598 = vand.u32 %v283, 4294901760
        %v599 = vsub.f32 %v283, %v598
        %v600 = vand.u32 %v599, 4294901760
        %601 = vmatpush.msra.mxu0 %v600
        %v602 = vand.u32 %v287, 4294901760
        %603 = vmatmul.f32.gmra.mxu0 %v602
        %v604 = vpop.f32.mrf.mxu0
        %v605 = vadd.f32 %v536, %v604
        %v606 = vand.u32 %v290, 4294901760
        %607 = vmatmul.f32.gmra.mxu0 %v606
        %v608 = vpop.f32.mrf.mxu0
        %v609 = vadd.f32 %v542, %v608
        %v610 = vand.u32 %v293, 4294901760
        %611 = vmatmul.f32.gmra.mxu0 %v610
        %v612 = vpop.f32.mrf.mxu0
        %v613 = vadd.f32 %v548, %v612
        %v614 = vand.u32 %v296, 4294901760
        %615 = vmatmul.f32.gmra.mxu0 %v614
        %v616 = vpop.f32.mrf.mxu0
        %v617 = vadd.f32 %v554, %v616
        %v618 = vand.u32 %v299, 4294901760
        %619 = vmatmul.f32.gmra.mxu0 %v618
        %v620 = vpop.f32.mrf.mxu0
        %v621 = vadd.f32 %v560, %v620
        %v622 = vand.u32 %v302, 4294901760
        %623 = vmatmul.f32.gmra.mxu0 %v622
        %v624 = vpop.f32.mrf.mxu0
        %v625 = vadd.f32 %v566, %v624
        %v626 = vand.u32 %v305, 4294901760
        %627 = vmatmul.f32.gmra.mxu0 %v626
        %v628 = vpop.f32.mrf.mxu0
        %v629 = vadd.f32 %v572, %v628
        %v630 = vand.u32 %v308, 4294901760
        %631 = vmatmul.f32.gmra.mxu0 %v630
        %v632 = vpop.f32.mrf.mxu0
        %v633 = vadd.f32 %v578, %v632
        %634 = vdwg.mxu0
        %635 = vmatpush.msra.mxu0 0.0
        %636 = vmatpush.msra.mxu0 0.0
        %637 = vmatpush.msra.mxu0 0.0
        %638 = vmatpush.msra.mxu0 0.0
        %639 = vmatpush.msra.mxu0 0.0
        %640 = vmatpush.msra.mxu0 0.0
        %641 = vmatpush.msra.mxu0 0.0
        %642 = vmatpush.msra.mxu0 0.0
        %643 = vmatpush.msra.mxu0 0.0
        %644 = vmatpush.msra.mxu0 0.0
        %645 = vmatpush.msra.mxu0 0.0
        %646 = vmatpush.msra.mxu0 0.0
        %647 = vmatpush.msra.mxu0 0.0
        %648 = vmatpush.msra.mxu0 0.0
        %v649 = vand.u32 %v284, 4294901760
        %650 = vmatpush.msra.mxu0 %v649
        %v651 = vand.u32 %v283, 4294901760
        %652 = vmatpush.msra.mxu0 %v651
        %v653 = vand.u32 %v287, 4294901760
        %654 = vmatmul.f32.gmra.mxu0 %v653
        %v655 = vpop.f32.mrf.mxu0
        %v656 = vadd.f32 %v605, %v655
        %v657 = vand.u32 %v290, 4294901760
        %658 = vmatmul.f32.gmra.mxu0 %v657
        %v659 = vpop.f32.mrf.mxu0
        %v660 = vadd.f32 %v609, %v659
        %v661 = vand.u32 %v293, 4294901760
        %662 = vmatmul.f32.gmra.mxu0 %v661
        %v663 = vpop.f32.mrf.mxu0
        %v664 = vadd.f32 %v613, %v663
        %v665 = vand.u32 %v296, 4294901760
        %666 = vmatmul.f32.gmra.mxu0 %v665
        %v667 = vpop.f32.mrf.mxu0
        %v668 = vadd.f32 %v617, %v667
        %v669 = vand.u32 %v299, 4294901760
        %670 = vmatmul.f32.gmra.mxu0 %v669
        %v671 = vpop.f32.mrf.mxu0
        %v672 = vadd.f32 %v621, %v671
        %v673 = vand.u32 %v302, 4294901760
        %674 = vmatmul.f32.gmra.mxu0 %v673
        %v675 = vpop.f32.mrf.mxu0
        %v676 = vadd.f32 %v625, %v675
        %v677 = vand.u32 %v305, 4294901760
        %678 = vmatmul.f32.gmra.mxu0 %v677
        %v679 = vpop.f32.mrf.mxu0
        %v680 = vadd.f32 %v629, %v679
        %v681 = vand.u32 %v308, 4294901760
        %682 = vmatmul.f32.gmra.mxu0 %v681
        %v683 = vpop.f32.mrf.mxu0
        %v684 = vadd.f32 %v633, %v683
        %685 = vdwg.mxu0
        %v686 = vld [vmem:[%s3] sm:$0xff]
        %v687 = vld [vmem:[%s3 + $0x8] sm:$0xff]
        %v689 = vsel %vm285, %v275, 0
        %v692 = vsel %vm285, %v276, 0
        %v695 = vsel %vm285, %v277, 0
        %v698 = vsel %vm285, %v278, 0
        %v701 = vsel %vm285, %v279, 0
        %v704 = vsel %vm285, %v280, 0
        %v707 = vsel %vm285, %v281, 0
        %v710 = vsel %vm285, %v282, 0
        %712 = vmatpush.msra.mxu0 0.0
        %713 = vmatpush.msra.mxu0 0.0
        %714 = vmatpush.msra.mxu0 0.0
        %715 = vmatpush.msra.mxu0 0.0
        %716 = vmatpush.msra.mxu0 0.0
        %717 = vmatpush.msra.mxu0 0.0
        %718 = vmatpush.msra.mxu0 0.0
        %719 = vmatpush.msra.mxu0 0.0
        %720 = vmatpush.msra.mxu0 0.0
        %721 = vmatpush.msra.mxu0 0.0
        %722 = vmatpush.msra.mxu0 0.0
        %723 = vmatpush.msra.mxu0 0.0
        %724 = vmatpush.msra.mxu0 0.0
        %725 = vmatpush.msra.mxu0 0.0
        %v726 = vand.u32 %v687, 4294901760
        %727 = vmatpush.msra.mxu0 %v726
        %v728 = vand.u32 %v686, 4294901760
        %729 = vmatpush.msra.mxu0 %v728
        %v730 = vand.u32 %v689, 4294901760
        %v731 = vsub.f32 %v689, %v730
        %v732 = vand.u32 %v731, 4294901760
        %v733 = vsub.f32 %v731, %v732
        %v734 = vand.u32 %v733, 4294901760
        %735 = vmatmul.f32.gmra.mxu0 %v734
        %v736 = vpop.f32.mrf.mxu0
        %v737 = vadd.f32 0.0, %v736
        %v738 = vand.u32 %v692, 4294901760
        %v739 = vsub.f32 %v692, %v738
        %v740 = vand.u32 %v739, 4294901760
        %v741 = vsub.f32 %v739, %v740
        %v742 = vand.u32 %v741, 4294901760
        %743 = vmatmul.f32.gmra.mxu0 %v742
        %v744 = vpop.f32.mrf.mxu0
        %v745 = vadd.f32 0.0, %v744
        %v746 = vand.u32 %v695, 4294901760
        %v747 = vsub.f32 %v695, %v746
        %v748 = vand.u32 %v747, 4294901760
        %v749 = vsub.f32 %v747, %v748
        %v750 = vand.u32 %v749, 4294901760
        %751 = vmatmul.f32.gmra.mxu0 %v750
        %v752 = vpop.f32.mrf.mxu0
        %v753 = vadd.f32 0.0, %v752
        %v754 = vand.u32 %v698, 4294901760
        %v755 = vsub.f32 %v698, %v754
        %v756 = vand.u32 %v755, 4294901760
        %v757 = vsub.f32 %v755, %v756
        %v758 = vand.u32 %v757, 4294901760
        %759 = vmatmul.f32.gmra.mxu0 %v758
        %v760 = vpop.f32.mrf.mxu0
        %v761 = vadd.f32 0.0, %v760
        %v762 = vand.u32 %v701, 4294901760
        %v763 = vsub.f32 %v701, %v762
        %v764 = vand.u32 %v763, 4294901760
        %v765 = vsub.f32 %v763, %v764
        %v766 = vand.u32 %v765, 4294901760
        %767 = vmatmul.f32.gmra.mxu0 %v766
        %v768 = vpop.f32.mrf.mxu0
        %v769 = vadd.f32 0.0, %v768
        %v770 = vand.u32 %v704, 4294901760
        %v771 = vsub.f32 %v704, %v770
        %v772 = vand.u32 %v771, 4294901760
        %v773 = vsub.f32 %v771, %v772
        %v774 = vand.u32 %v773, 4294901760
        %775 = vmatmul.f32.gmra.mxu0 %v774
        %v776 = vpop.f32.mrf.mxu0
        %v777 = vadd.f32 0.0, %v776
        %v778 = vand.u32 %v707, 4294901760
        %v779 = vsub.f32 %v707, %v778
        %v780 = vand.u32 %v779, 4294901760
        %v781 = vsub.f32 %v779, %v780
        %v782 = vand.u32 %v781, 4294901760
        %783 = vmatmul.f32.gmra.mxu0 %v782
        %v784 = vpop.f32.mrf.mxu0
        %v785 = vadd.f32 0.0, %v784
        %v786 = vand.u32 %v710, 4294901760
        %v787 = vsub.f32 %v710, %v786
        %v788 = vand.u32 %v787, 4294901760
        %v789 = vsub.f32 %v787, %v788
        %v790 = vand.u32 %v789, 4294901760
        %791 = vmatmul.f32.gmra.mxu0 %v790
        %v792 = vpop.f32.mrf.mxu0
        %v793 = vadd.f32 0.0, %v792
        %794 = vdwg.mxu0
        %795 = vmatpush.msra.mxu0 0.0
        %796 = vmatpush.msra.mxu0 0.0
        %797 = vmatpush.msra.mxu0 0.0
        %798 = vmatpush.msra.mxu0 0.0
        %799 = vmatpush.msra.mxu0 0.0
        %800 = vmatpush.msra.mxu0 0.0
        %801 = vmatpush.msra.mxu0 0.0
        %802 = vmatpush.msra.mxu0 0.0
        %803 = vmatpush.msra.mxu0 0.0
        %804 = vmatpush.msra.mxu0 0.0
        %805 = vmatpush.msra.mxu0 0.0
        %806 = vmatpush.msra.mxu0 0.0
        %807 = vmatpush.msra.mxu0 0.0
        %808 = vmatpush.msra.mxu0 0.0
        %v809 = vand.u32 %v687, 4294901760
        %v810 = vsub.f32 %v687, %v809
        %v811 = vand.u32 %v810, 4294901760
        %v812 = vsub.f32 %v810, %v811
        %v813 = vand.u32 %v812, 4294901760
        %814 = vmatpush.msra.mxu0 %v813
        %v815 = vand.u32 %v686, 4294901760
        %v816 = vsub.f32 %v686, %v815
        %v817 = vand.u32 %v816, 4294901760
        %v818 = vsub.f32 %v816, %v817
        %v819 = vand.u32 %v818, 4294901760
        %820 = vmatpush.msra.mxu0 %v819
        %v821 = vand.u32 %v689, 4294901760
        %822 = vmatmul.f32.gmra.mxu0 %v821
        %v823 = vpop.f32.mrf.mxu0
        %v824 = vadd.f32 %v737, %v823
        %v825 = vand.u32 %v692, 4294901760
        %826 = vmatmul.f32.gmra.mxu0 %v825
        %v827 = vpop.f32.mrf.mxu0
        %v828 = vadd.f32 %v745, %v827
        %v829 = vand.u32 %v695, 4294901760
        %830 = vmatmul.f32.gmra.mxu0 %v829
        %v831 = vpop.f32.mrf.mxu0
        %v832 = vadd.f32 %v753, %v831
        %v833 = vand.u32 %v698, 4294901760
        %834 = vmatmul.f32.gmra.mxu0 %v833
        %v835 = vpop.f32.mrf.mxu0
        %v836 = vadd.f32 %v761, %v835
        %v837 = vand.u32 %v701, 4294901760
        %838 = vmatmul.f32.gmra.mxu0 %v837
        %v839 = vpop.f32.mrf.mxu0
        %v840 = vadd.f32 %v769, %v839
        %v841 = vand.u32 %v704, 4294901760
        %842 = vmatmul.f32.gmra.mxu0 %v841
        %v843 = vpop.f32.mrf.mxu0
        %v844 = vadd.f32 %v777, %v843
        %v845 = vand.u32 %v707, 4294901760
        %846 = vmatmul.f32.gmra.mxu0 %v845
        %v847 = vpop.f32.mrf.mxu0
        %v848 = vadd.f32 %v785, %v847
        %v849 = vand.u32 %v710, 4294901760
        %850 = vmatmul.f32.gmra.mxu0 %v849
        %v851 = vpop.f32.mrf.mxu0
        %v852 = vadd.f32 %v793, %v851
        %853 = vdwg.mxu0
        %854 = vmatpush.msra.mxu0 0.0
        %855 = vmatpush.msra.mxu0 0.0
        %856 = vmatpush.msra.mxu0 0.0
        %857 = vmatpush.msra.mxu0 0.0
        %858 = vmatpush.msra.mxu0 0.0
        %859 = vmatpush.msra.mxu0 0.0
        %860 = vmatpush.msra.mxu0 0.0
        %861 = vmatpush.msra.mxu0 0.0
        %862 = vmatpush.msra.mxu0 0.0
        %863 = vmatpush.msra.mxu0 0.0
        %864 = vmatpush.msra.mxu0 0.0
        %865 = vmatpush.msra.mxu0 0.0
        %866 = vmatpush.msra.mxu0 0.0
        %867 = vmatpush.msra.mxu0 0.0
        %v868 = vand.u32 %v687, 4294901760
        %v869 = vsub.f32 %v687, %v868
        %870 = vmatpush.msra.mxu0 %v869
        %v871 = vand.u32 %v686, 4294901760
        %v872 = vsub.f32 %v686, %v871
        %873 = vmatpush.msra.mxu0 %v872
        %v874 = vand.u32 %v689, 4294901760
        %v875 = vsub.f32 %v689, %v874
        %876 = vmatmul.f32.gmra.mxu0 %v875
        %v877 = vpop.f32.mrf.mxu0
        %v878 = vadd.f32 %v824, %v877
        %v879 = vand.u32 %v692, 4294901760
        %v880 = vsub.f32 %v692, %v879
        %881 = vmatmul.f32.gmra.mxu0 %v880
        %v882 = vpop.f32.mrf.mxu0
        %v883 = vadd.f32 %v828, %v882
        %v884 = vand.u32 %v695, 4294901760
        %v885 = vsub.f32 %v695, %v884
        %886 = vmatmul.f32.gmra.mxu0 %v885
        %v887 = vpop.f32.mrf.mxu0
        %v888 = vadd.f32 %v832, %v887
        %v889 = vand.u32 %v698, 4294901760
        %v890 = vsub.f32 %v698, %v889
        %891 = vmatmul.f32.gmra.mxu0 %v890
        %v892 = vpop.f32.mrf.mxu0
        %v893 = vadd.f32 %v836, %v892
        %v894 = vand.u32 %v701, 4294901760
        %v895 = vsub.f32 %v701, %v894
        %896 = vmatmul.f32.gmra.mxu0 %v895
        %v897 = vpop.f32.mrf.mxu0
        %v898 = vadd.f32 %v840, %v897
        %v899 = vand.u32 %v704, 4294901760
        %v900 = vsub.f32 %v704, %v899
        %901 = vmatmul.f32.gmra.mxu0 %v900
        %v902 = vpop.f32.mrf.mxu0
        %v903 = vadd.f32 %v844, %v902
        %v904 = vand.u32 %v707, 4294901760
        %v905 = vsub.f32 %v707, %v904
        %906 = vmatmul.f32.gmra.mxu0 %v905
        %v907 = vpop.f32.mrf.mxu0
        %v908 = vadd.f32 %v848, %v907
        %v909 = vand.u32 %v710, 4294901760
        %v910 = vsub.f32 %v710, %v909
        %911 = vmatmul.f32.gmra.mxu0 %v910
        %v912 = vpop.f32.mrf.mxu0
        %v913 = vadd.f32 %v852, %v912
        %914 = vdwg.mxu0
        %915 = vmatpush.msra.mxu0 0.0
        %916 = vmatpush.msra.mxu0 0.0
        %917 = vmatpush.msra.mxu0 0.0
        %918 = vmatpush.msra.mxu0 0.0
        %919 = vmatpush.msra.mxu0 0.0
        %920 = vmatpush.msra.mxu0 0.0
        %921 = vmatpush.msra.mxu0 0.0
        %922 = vmatpush.msra.mxu0 0.0
        %923 = vmatpush.msra.mxu0 0.0
        %924 = vmatpush.msra.mxu0 0.0
        %925 = vmatpush.msra.mxu0 0.0
        %926 = vmatpush.msra.mxu0 0.0
        %927 = vmatpush.msra.mxu0 0.0
        %928 = vmatpush.msra.mxu0 0.0
        %v929 = vand.u32 %v687, 4294901760
        %930 = vmatpush.msra.mxu0 %v929
        %v931 = vand.u32 %v686, 4294901760
        %932 = vmatpush.msra.mxu0 %v931
        %v933 = vand.u32 %v689, 4294901760
        %v934 = vsub.f32 %v689, %v933
        %v935 = vand.u32 %v934, 4294901760
        %936 = vmatmul.f32.gmra.mxu0 %v935
        %v937 = vpop.f32.mrf.mxu0
        %v938 = vadd.f32 %v878, %v937
        %v939 = vand.u32 %v692, 4294901760
        %v940 = vsub.f32 %v692, %v939
        %v941 = vand.u32 %v940, 4294901760
        %942 = vmatmul.f32.gmra.mxu0 %v941
        %v943 = vpop.f32.mrf.mxu0
        %v944 = vadd.f32 %v883, %v943
        %v945 = vand.u32 %v695, 4294901760
        %v946 = vsub.f32 %v695, %v945
        %v947 = vand.u32 %v946, 4294901760
        %948 = vmatmul.f32.gmra.mxu0 %v947
        %v949 = vpop.f32.mrf.mxu0
        %v950 = vadd.f32 %v888, %v949
        %v951 = vand.u32 %v698, 4294901760
        %v952 = vsub.f32 %v698, %v951
        %v953 = vand.u32 %v952, 4294901760
        %954 = vmatmul.f32.gmra.mxu0 %v953
        %v955 = vpop.f32.mrf.mxu0
        %v956 = vadd.f32 %v893, %v955
        %v957 = vand.u32 %v701, 4294901760
        %v958 = vsub.f32 %v701, %v957
        %v959 = vand.u32 %v958, 4294901760
        %960 = vmatmul.f32.gmra.mxu0 %v959
        %v961 = vpop.f32.mrf.mxu0
        %v962 = vadd.f32 %v898, %v961
        %v963 = vand.u32 %v704, 4294901760
        %v964 = vsub.f32 %v704, %v963
        %v965 = vand.u32 %v964, 4294901760
        %966 = vmatmul.f32.gmra.mxu0 %v965
        %v967 = vpop.f32.mrf.mxu0
        %v968 = vadd.f32 %v903, %v967
        %v969 = vand.u32 %v707, 4294901760
        %v970 = vsub.f32 %v707, %v969
        %v971 = vand.u32 %v970, 4294901760
        %972 = vmatmul.f32.gmra.mxu0 %v971
        %v973 = vpop.f32.mrf.mxu0
        %v974 = vadd.f32 %v908, %v973
        %v975 = vand.u32 %v710, 4294901760
        %v976 = vsub.f32 %v710, %v975
        %v977 = vand.u32 %v976, 4294901760
        %978 = vmatmul.f32.gmra.mxu0 %v977
        %v979 = vpop.f32.mrf.mxu0
        %v980 = vadd.f32 %v913, %v979
        %981 = vdwg.mxu0
        %982 = vmatpush.msra.mxu0 0.0
        %983 = vmatpush.msra.mxu0 0.0
        %984 = vmatpush.msra.mxu0 0.0
        %985 = vmatpush.msra.mxu0 0.0
        %986 = vmatpush.msra.mxu0 0.0
        %987 = vmatpush.msra.mxu0 0.0
        %988 = vmatpush.msra.mxu0 0.0
        %989 = vmatpush.msra.mxu0 0.0
        %990 = vmatpush.msra.mxu0 0.0
        %991 = vmatpush.msra.mxu0 0.0
        %992 = vmatpush.msra.mxu0 0.0
        %993 = vmatpush.msra.mxu0 0.0
        %994 = vmatpush.msra.mxu0 0.0
        %995 = vmatpush.msra.mxu0 0.0
        %v996 = vand.u32 %v687, 4294901760
        %v997 = vsub.f32 %v687, %v996
        %v998 = vand.u32 %v997, 4294901760
        %999 = vmatpush.msra.mxu0 %v998
        %v1000 = vand.u32 %v686, 4294901760
        %v1001 = vsub.f32 %v686, %v1000
        %v1002 = vand.u32 %v1001, 4294901760
        %1003 = vmatpush.msra.mxu0 %v1002
        %v1004 = vand.u32 %v689, 4294901760
        %1005 = vmatmul.f32.gmra.mxu0 %v1004
        %v1006 = vpop.f32.mrf.mxu0
        %v1007 = vadd.f32 %v938, %v1006
        %v1008 = vand.u32 %v692, 4294901760
        %1009 = vmatmul.f32.gmra.mxu0 %v1008
        %v1010 = vpop.f32.mrf.mxu0
        %v1011 = vadd.f32 %v944, %v1010
        %v1012 = vand.u32 %v695, 4294901760
        %1013 = vmatmul.f32.gmra.mxu0 %v1012
        %v1014 = vpop.f32.mrf.mxu0
        %v1015 = vadd.f32 %v950, %v1014
        %v1016 = vand.u32 %v698, 4294901760
        %1017 = vmatmul.f32.gmra.mxu0 %v1016
        %v1018 = vpop.f32.mrf.mxu0
        %v1019 = vadd.f32 %v956, %v1018
        %v1020 = vand.u32 %v701, 4294901760
        %1021 = vmatmul.f32.gmra.mxu0 %v1020
        %v1022 = vpop.f32.mrf.mxu0
        %v1023 = vadd.f32 %v962, %v1022
        %v1024 = vand.u32 %v704, 4294901760
        %1025 = vmatmul.f32.gmra.mxu0 %v1024
        %v1026 = vpop.f32.mrf.mxu0
        %v1027 = vadd.f32 %v968, %v1026
        %v1028 = vand.u32 %v707, 4294901760
        %1029 = vmatmul.f32.gmra.mxu0 %v1028
        %v1030 = vpop.f32.mrf.mxu0
        %v1031 = vadd.f32 %v974, %v1030
        %v1032 = vand.u32 %v710, 4294901760
        %1033 = vmatmul.f32.gmra.mxu0 %v1032
        %v1034 = vpop.f32.mrf.mxu0
        %v1035 = vadd.f32 %v980, %v1034
        %1036 = vdwg.mxu0
        %1037 = vmatpush.msra.mxu0 0.0
        %1038 = vmatpush.msra.mxu0 0.0
        %1039 = vmatpush.msra.mxu0 0.0
        %1040 = vmatpush.msra.mxu0 0.0
        %1041 = vmatpush.msra.mxu0 0.0
        %1042 = vmatpush.msra.mxu0 0.0
        %1043 = vmatpush.msra.mxu0 0.0
        %1044 = vmatpush.msra.mxu0 0.0
        %1045 = vmatpush.msra.mxu0 0.0
        %1046 = vmatpush.msra.mxu0 0.0
        %1047 = vmatpush.msra.mxu0 0.0
        %1048 = vmatpush.msra.mxu0 0.0
        %1049 = vmatpush.msra.mxu0 0.0
        %1050 = vmatpush.msra.mxu0 0.0
        %v1051 = vand.u32 %v687, 4294901760
        %1052 = vmatpush.msra.mxu0 %v1051
        %v1053 = vand.u32 %v686, 4294901760
        %1054 = vmatpush.msra.mxu0 %v1053
        %v1055 = vand.u32 %v689, 4294901760
        %1056 = vmatmul.f32.gmra.mxu0 %v1055
        %v1057 = vpop.f32.mrf.mxu0
        %v1058 = vadd.f32 %v1007, %v1057
        %v1059 = vand.u32 %v692, 4294901760
        %1060 = vmatmul.f32.gmra.mxu0 %v1059
        %v1061 = vpop.f32.mrf.mxu0
        %v1062 = vadd.f32 %v1011, %v1061
        %v1063 = vand.u32 %v695, 4294901760
        %1064 = vmatmul.f32.gmra.mxu0 %v1063
        %v1065 = vpop.f32.mrf.mxu0
        %v1066 = vadd.f32 %v1015, %v1065
        %v1067 = vand.u32 %v698, 4294901760
        %1068 = vmatmul.f32.gmra.mxu0 %v1067
        %v1069 = vpop.f32.mrf.mxu0
        %v1070 = vadd.f32 %v1019, %v1069
        %v1071 = vand.u32 %v701, 4294901760
        %1072 = vmatmul.f32.gmra.mxu0 %v1071
        %v1073 = vpop.f32.mrf.mxu0
        %v1074 = vadd.f32 %v1023, %v1073
        %v1075 = vand.u32 %v704, 4294901760
        %1076 = vmatmul.f32.gmra.mxu0 %v1075
        %v1077 = vpop.f32.mrf.mxu0
        %v1078 = vadd.f32 %v1027, %v1077
        %v1079 = vand.u32 %v707, 4294901760
        %1080 = vmatmul.f32.gmra.mxu0 %v1079
        %v1081 = vpop.f32.mrf.mxu0
        %v1082 = vadd.f32 %v1031, %v1081
        %v1083 = vand.u32 %v710, 4294901760
        %1084 = vmatmul.f32.gmra.mxu0 %v1083
        %v1085 = vpop.f32.mrf.mxu0
        %v1086 = vadd.f32 %v1035, %v1085
        %1087 = vdwg.mxu0
        %1096 = vrot.lane.b32.xlu0 %v656, 96
        %v1097 = vpop.permute.xlu0 %1096
        %1098 = vrot.lane.b32.xlu0 %v660, 96
        %v1099 = vpop.permute.xlu0 %1098
        %1100 = vrot.lane.b32.xlu0 %v664, 96
        %v1101 = vpop.permute.xlu0 %1100
        %1102 = vrot.lane.b32.xlu0 %v668, 96
        %v1103 = vpop.permute.xlu0 %1102
        %1104 = vrot.lane.b32.xlu0 %v672, 96
        %v1105 = vpop.permute.xlu0 %1104
        %1106 = vrot.lane.b32.xlu0 %v676, 96
        %v1107 = vpop.permute.xlu0 %1106
        %1108 = vrot.lane.b32.xlu0 %v680, 96
        %v1109 = vpop.permute.xlu0 %1108
        %1110 = vrot.lane.b32.xlu0 %v684, 96
        %v1111 = vpop.permute.xlu0 %1110
        %v1120 = vmul.f32 %v656, %v1097
        %v1121 = vmul.f32 %v660, %v1099
        %v1122 = vmul.f32 %v664, %v1101
        %v1123 = vmul.f32 %v668, %v1103
        %v1124 = vmul.f32 %v672, %v1105
        %v1125 = vmul.f32 %v676, %v1107
        %v1126 = vmul.f32 %v680, %v1109
        %v1127 = vmul.f32 %v684, %v1111
        %1136 = vrot.lane.b32.xlu0 %v1120, 96
        %v1137 = vpop.permute.xlu0 %1136
        %1138 = vrot.lane.b32.xlu0 %v1121, 96
        %v1139 = vpop.permute.xlu0 %1138
        %1140 = vrot.lane.b32.xlu0 %v1122, 96
        %v1141 = vpop.permute.xlu0 %1140
        %1142 = vrot.lane.b32.xlu0 %v1123, 96
        %v1143 = vpop.permute.xlu0 %1142
        %1144 = vrot.lane.b32.xlu0 %v1124, 96
        %v1145 = vpop.permute.xlu0 %1144
        %1146 = vrot.lane.b32.xlu0 %v1125, 96
        %v1147 = vpop.permute.xlu0 %1146
        %1148 = vrot.lane.b32.xlu0 %v1126, 96
        %v1149 = vpop.permute.xlu0 %1148
        %1150 = vrot.lane.b32.xlu0 %v1127, 96
        %v1151 = vpop.permute.xlu0 %1150
        %vm1160 = vcmask 261120
        %v1161 = vsel %vm1160, %v1137, 0.0
        %1162 = vadd.xlane.f32.xlu0 %v1161
        %v1163 = vpop.xlane.xlu0 %1162
        %v1164 = vsel %vm1160, %v1139, 0.0
        %1165 = vadd.xlane.f32.xlu0 %v1164
        %v1166 = vpop.xlane.xlu0 %1165
        %v1167 = vsel %vm1160, %v1141, 0.0
        %1168 = vadd.xlane.f32.xlu0 %v1167
        %v1169 = vpop.xlane.xlu0 %1168
        %v1170 = vsel %vm1160, %v1143, 0.0
        %1171 = vadd.xlane.f32.xlu0 %v1170
        %v1172 = vpop.xlane.xlu0 %1171
        %v1173 = vsel %vm1160, %v1145, 0.0
        %1174 = vadd.xlane.f32.xlu0 %v1173
        %v1175 = vpop.xlane.xlu0 %1174
        %v1176 = vsel %vm1160, %v1147, 0.0
        %1177 = vadd.xlane.f32.xlu0 %v1176
        %v1178 = vpop.xlane.xlu0 %1177
        %v1179 = vsel %vm1160, %v1149, 0.0
        %1180 = vadd.xlane.f32.xlu0 %v1179
        %v1181 = vpop.xlane.xlu0 %1180
        %v1182 = vsel %vm1160, %v1151, 0.0
        %1183 = vadd.xlane.f32.xlu0 %v1182
        %v1184 = vpop.xlane.xlu0 %1183
        %v1185 = vmul.f32 %v1058, %v1097
        %v1186 = vmul.f32 %v1062, %v1099
        %v1187 = vmul.f32 %v1066, %v1101
        %v1188 = vmul.f32 %v1070, %v1103
        %v1189 = vmul.f32 %v1074, %v1105
        %v1190 = vmul.f32 %v1078, %v1107
        %v1191 = vmul.f32 %v1082, %v1109
        %v1192 = vmul.f32 %v1086, %v1111
        %1201 = vrot.lane.b32.xlu0 %v1185, 96
        %v1202 = vpop.permute.xlu0 %1201
        %1203 = vrot.lane.b32.xlu0 %v1186, 96
        %v1204 = vpop.permute.xlu0 %1203
        %1205 = vrot.lane.b32.xlu0 %v1187, 96
        %v1206 = vpop.permute.xlu0 %1205
        %1207 = vrot.lane.b32.xlu0 %v1188, 96
        %v1208 = vpop.permute.xlu0 %1207
        %1209 = vrot.lane.b32.xlu0 %v1189, 96
        %v1210 = vpop.permute.xlu0 %1209
        %1211 = vrot.lane.b32.xlu0 %v1190, 96
        %v1212 = vpop.permute.xlu0 %1211
        %1213 = vrot.lane.b32.xlu0 %v1191, 96
        %v1214 = vpop.permute.xlu0 %1213
        %1215 = vrot.lane.b32.xlu0 %v1192, 96
        %v1216 = vpop.permute.xlu0 %1215
        %v1225 = vsel %vm1160, %v1202, 0.0
        %1226 = vadd.xlane.f32.xlu0 %v1225
        %v1227 = vpop.xlane.xlu0 %1226
        %v1228 = vsel %vm1160, %v1204, 0.0
        %1229 = vadd.xlane.f32.xlu0 %v1228
        %v1230 = vpop.xlane.xlu0 %1229
        %v1231 = vsel %vm1160, %v1206, 0.0
        %1232 = vadd.xlane.f32.xlu0 %v1231
        %v1233 = vpop.xlane.xlu0 %1232
        %v1234 = vsel %vm1160, %v1208, 0.0
        %1235 = vadd.xlane.f32.xlu0 %v1234
        %v1236 = vpop.xlane.xlu0 %1235
        %v1237 = vsel %vm1160, %v1210, 0.0
        %1238 = vadd.xlane.f32.xlu0 %v1237
        %v1239 = vpop.xlane.xlu0 %1238
        %v1240 = vsel %vm1160, %v1212, 0.0
        %1241 = vadd.xlane.f32.xlu0 %v1240
        %v1242 = vpop.xlane.xlu0 %1241
        %v1243 = vsel %vm1160, %v1214, 0.0
        %1244 = vadd.xlane.f32.xlu0 %v1243
        %v1245 = vpop.xlane.xlu0 %1244
        %v1246 = vsel %vm1160, %v1216, 0.0
        %1247 = vadd.xlane.f32.xlu0 %v1246
        %v1248 = vpop.xlane.xlu0 %1247
        %1257 = vrot.lane.b32.xlu0 %v1058, 96
        %v1258 = vpop.permute.xlu0 %1257
        %1259 = vrot.lane.b32.xlu0 %v1062, 96
        %v1260 = vpop.permute.xlu0 %1259
        %1261 = vrot.lane.b32.xlu0 %v1066, 96
        %v1262 = vpop.permute.xlu0 %1261
        %1263 = vrot.lane.b32.xlu0 %v1070, 96
        %v1264 = vpop.permute.xlu0 %1263
        %1265 = vrot.lane.b32.xlu0 %v1074, 96
        %v1266 = vpop.permute.xlu0 %1265
        %1267 = vrot.lane.b32.xlu0 %v1078, 96
        %v1268 = vpop.permute.xlu0 %1267
        %1269 = vrot.lane.b32.xlu0 %v1082, 96
        %v1270 = vpop.permute.xlu0 %1269
        %1271 = vrot.lane.b32.xlu0 %v1086, 96
        %v1272 = vpop.permute.xlu0 %1271
        %v1281 = vmul.f32 %v656, %v1258
        %v1282 = vmul.f32 %v660, %v1260
        %v1283 = vmul.f32 %v664, %v1262
        %v1284 = vmul.f32 %v668, %v1264
        %v1285 = vmul.f32 %v672, %v1266
        %v1286 = vmul.f32 %v676, %v1268
        %v1287 = vmul.f32 %v680, %v1270
        %v1288 = vmul.f32 %v684, %v1272
        %1297 = vrot.lane.b32.xlu0 %v1281, 96
        %v1298 = vpop.permute.xlu0 %1297
        %1299 = vrot.lane.b32.xlu0 %v1282, 96
        %v1300 = vpop.permute.xlu0 %1299
        %1301 = vrot.lane.b32.xlu0 %v1283, 96
        %v1302 = vpop.permute.xlu0 %1301
        %1303 = vrot.lane.b32.xlu0 %v1284, 96
        %v1304 = vpop.permute.xlu0 %1303
        %1305 = vrot.lane.b32.xlu0 %v1285, 96
        %v1306 = vpop.permute.xlu0 %1305
        %1307 = vrot.lane.b32.xlu0 %v1286, 96
        %v1308 = vpop.permute.xlu0 %1307
        %1309 = vrot.lane.b32.xlu0 %v1287, 96
        %v1310 = vpop.permute.xlu0 %1309
        %1311 = vrot.lane.b32.xlu0 %v1288, 96
        %v1312 = vpop.permute.xlu0 %1311
        %v1321 = vsel %vm1160, %v1298, 0.0
        %1322 = vadd.xlane.f32.xlu0 %v1321
        %v1323 = vpop.xlane.xlu0 %1322
        %v1324 = vsel %vm1160, %v1300, 0.0
        %1325 = vadd.xlane.f32.xlu0 %v1324
        %v1326 = vpop.xlane.xlu0 %1325
        %v1327 = vsel %vm1160, %v1302, 0.0
        %1328 = vadd.xlane.f32.xlu0 %v1327
        %v1329 = vpop.xlane.xlu0 %1328
        %v1330 = vsel %vm1160, %v1304, 0.0
        %1331 = vadd.xlane.f32.xlu0 %v1330
        %v1332 = vpop.xlane.xlu0 %1331
        %v1333 = vsel %vm1160, %v1306, 0.0
        %1334 = vadd.xlane.f32.xlu0 %v1333
        %v1335 = vpop.xlane.xlu0 %1334
        %v1336 = vsel %vm1160, %v1308, 0.0
        %1337 = vadd.xlane.f32.xlu0 %v1336
        %v1338 = vpop.xlane.xlu0 %1337
        %v1339 = vsel %vm1160, %v1310, 0.0
        %1340 = vadd.xlane.f32.xlu0 %v1339
        %v1341 = vpop.xlane.xlu0 %1340
        %v1342 = vsel %vm1160, %v1312, 0.0
        %1343 = vadd.xlane.f32.xlu0 %v1342
        %v1344 = vpop.xlane.xlu0 %1343
        %v1345 = vmul.f32 %v1058, %v1258
        %v1346 = vmul.f32 %v1062, %v1260
        %v1347 = vmul.f32 %v1066, %v1262
        %v1348 = vmul.f32 %v1070, %v1264
        %v1349 = vmul.f32 %v1074, %v1266
        %v1350 = vmul.f32 %v1078, %v1268
        %v1351 = vmul.f32 %v1082, %v1270
        %v1352 = vmul.f32 %v1086, %v1272
        %1361 = vrot.lane.b32.xlu0 %v1345, 96
        %v1362 = vpop.permute.xlu0 %1361
        %1363 = vrot.lane.b32.xlu0 %v1346, 96
        %v1364 = vpop.permute.xlu0 %1363
        %1365 = vrot.lane.b32.xlu0 %v1347, 96
        %v1366 = vpop.permute.xlu0 %1365
        %1367 = vrot.lane.b32.xlu0 %v1348, 96
        %v1368 = vpop.permute.xlu0 %1367
        %1369 = vrot.lane.b32.xlu0 %v1349, 96
        %v1370 = vpop.permute.xlu0 %1369
        %1371 = vrot.lane.b32.xlu0 %v1350, 96
        %v1372 = vpop.permute.xlu0 %1371
        %1373 = vrot.lane.b32.xlu0 %v1351, 96
        %v1374 = vpop.permute.xlu0 %1373
        %1375 = vrot.lane.b32.xlu0 %v1352, 96
        %v1376 = vpop.permute.xlu0 %1375
        %v1385 = vsel %vm1160, %v1362, 0.0
        %1386 = vadd.xlane.f32.xlu0 %v1385
        %v1387 = vpop.xlane.xlu0 %1386
        %v1388 = vsel %vm1160, %v1364, 0.0
        %1389 = vadd.xlane.f32.xlu0 %v1388
        %v1390 = vpop.xlane.xlu0 %1389
        %v1391 = vsel %vm1160, %v1366, 0.0
        %1392 = vadd.xlane.f32.xlu0 %v1391
        %v1393 = vpop.xlane.xlu0 %1392
        %v1394 = vsel %vm1160, %v1368, 0.0
        %1395 = vadd.xlane.f32.xlu0 %v1394
        %v1396 = vpop.xlane.xlu0 %1395
        %v1397 = vsel %vm1160, %v1370, 0.0
        %1398 = vadd.xlane.f32.xlu0 %v1397
        %v1399 = vpop.xlane.xlu0 %1398
        %v1400 = vsel %vm1160, %v1372, 0.0
        %1401 = vadd.xlane.f32.xlu0 %v1400
        %v1402 = vpop.xlane.xlu0 %1401
        %v1403 = vsel %vm1160, %v1374, 0.0
        %1404 = vadd.xlane.f32.xlu0 %v1403
        %v1405 = vpop.xlane.xlu0 %1404
        %v1406 = vsel %vm1160, %v1376, 0.0
        %1407 = vadd.xlane.f32.xlu0 %v1406
        %v1408 = vpop.xlane.xlu0 %1407
        %v1409 = vmax.f32 %v1163, %v1227
        %v1410 = vmax.f32 %v1166, %v1230
        %v1411 = vmax.f32 %v1169, %v1233
        %v1412 = vmax.f32 %v1172, %v1236
        %v1413 = vmax.f32 %v1175, %v1239
        %v1414 = vmax.f32 %v1178, %v1242
        %v1415 = vmax.f32 %v1181, %v1245
        %v1416 = vmax.f32 %v1184, %v1248
        %v1417 = vsub.f32 %v1163, %v1409
        %v1418 = vsub.f32 %v1166, %v1410
        %v1419 = vsub.f32 %v1169, %v1411
        %v1420 = vsub.f32 %v1172, %v1412
        %v1421 = vsub.f32 %v1175, %v1413
        %v1422 = vsub.f32 %v1178, %v1414
        %v1423 = vsub.f32 %v1181, %v1415
        %v1424 = vsub.f32 %v1184, %v1416
        %v1425 = vmul.f32 %v1417, 1.442695
        %v1426 = vpow.pop %v1425
        %v1427 = vmul.f32 %v1418, 1.442695
        %v1428 = vpow.pop %v1427
        %v1429 = vmul.f32 %v1419, 1.442695
        %v1430 = vpow.pop %v1429
        %v1431 = vmul.f32 %v1420, 1.442695
        %v1432 = vpow.pop %v1431
        %v1433 = vmul.f32 %v1421, 1.442695
        %v1434 = vpow.pop %v1433
        %v1435 = vmul.f32 %v1422, 1.442695
        %v1436 = vpow.pop %v1435
        %v1437 = vmul.f32 %v1423, 1.442695
        %v1438 = vpow.pop %v1437
        %v1439 = vmul.f32 %v1424, 1.442695
        %v1440 = vpow.pop %v1439
        %v1441 = vsub.f32 %v1227, %v1409
        %v1442 = vsub.f32 %v1230, %v1410
        %v1443 = vsub.f32 %v1233, %v1411
        %v1444 = vsub.f32 %v1236, %v1412
        %v1445 = vsub.f32 %v1239, %v1413
        %v1446 = vsub.f32 %v1242, %v1414
        %v1447 = vsub.f32 %v1245, %v1415
        %v1448 = vsub.f32 %v1248, %v1416
        %v1449 = vmul.f32 %v1441, 1.442695
        %v1450 = vpow.pop %v1449
        %v1451 = vmul.f32 %v1442, 1.442695
        %v1452 = vpow.pop %v1451
        %v1453 = vmul.f32 %v1443, 1.442695
        %v1454 = vpow.pop %v1453
        %v1455 = vmul.f32 %v1444, 1.442695
        %v1456 = vpow.pop %v1455
        %v1457 = vmul.f32 %v1445, 1.442695
        %v1458 = vpow.pop %v1457
        %v1459 = vmul.f32 %v1446, 1.442695
        %v1460 = vpow.pop %v1459
        %v1461 = vmul.f32 %v1447, 1.442695
        %v1462 = vpow.pop %v1461
        %v1463 = vmul.f32 %v1448, 1.442695
        %v1464 = vpow.pop %v1463
        %v1465 = vadd.f32 %v1426, %v1450
        %v1466 = vadd.f32 %v1428, %v1452
        %v1467 = vadd.f32 %v1430, %v1454
        %v1468 = vadd.f32 %v1432, %v1456
        %v1469 = vadd.f32 %v1434, %v1458
        %v1470 = vadd.f32 %v1436, %v1460
        %v1471 = vadd.f32 %v1438, %v1462
        %v1472 = vadd.f32 %v1440, %v1464
        %v1473 = vrcp.pop %v1465
        %v1474 = vmul.f32 %v1465, %v1473
        %v1475 = vsub.f32 1.0, %v1474
        %v1476 = vmul.f32 %v1473, %v1475
        %v1477 = vadd.f32 %v1473, %v1476
        %vm1478 = vweird.f32 %v1465
        %vm1479 = vweird.f32 %v1473
        %vm1480 = vmor %vm1478, %vm1479
        %v1481 = vsel %vm1480, %v1473, %v1477
        %v1482 = vand.u32 2147483647, %v1465
        %vm1483 = vcmp.eq.f32.partialorder %v1482, 8.507059e+37
        %v1484 = vand.u32 %v1465, 2147483648
        %v1485 = vor.u32 1.1754944e-38, %v1484
        %v1486 = vsel %vm1483, %v1485, %v1481
        %v1487 = vmul.f32 1.0, %v1486
        %v1488 = vrcp.pop %v1466
        %v1489 = vmul.f32 %v1466, %v1488
        %v1490 = vsub.f32 1.0, %v1489
        %v1491 = vmul.f32 %v1488, %v1490
        %v1492 = vadd.f32 %v1488, %v1491
        %vm1493 = vweird.f32 %v1466
        %vm1494 = vweird.f32 %v1488
        %vm1495 = vmor %vm1493, %vm1494
        %v1496 = vsel %vm1495, %v1488, %v1492
        %v1497 = vand.u32 2147483647, %v1466
        %vm1498 = vcmp.eq.f32.partialorder %v1497, 8.507059e+37
        %v1499 = vand.u32 %v1466, 2147483648
        %v1500 = vor.u32 1.1754944e-38, %v1499
        %v1501 = vsel %vm1498, %v1500, %v1496
        %v1502 = vmul.f32 1.0, %v1501
        %v1503 = vrcp.pop %v1467
        %v1504 = vmul.f32 %v1467, %v1503
        %v1505 = vsub.f32 1.0, %v1504
        %v1506 = vmul.f32 %v1503, %v1505
        %v1507 = vadd.f32 %v1503, %v1506
        %vm1508 = vweird.f32 %v1467
        %vm1509 = vweird.f32 %v1503
        %vm1510 = vmor %vm1508, %vm1509
        %v1511 = vsel %vm1510, %v1503, %v1507
        %v1512 = vand.u32 2147483647, %v1467
        %vm1513 = vcmp.eq.f32.partialorder %v1512, 8.507059e+37
        %v1514 = vand.u32 %v1467, 2147483648
        %v1515 = vor.u32 1.1754944e-38, %v1514
        %v1516 = vsel %vm1513, %v1515, %v1511
        %v1517 = vmul.f32 1.0, %v1516
        %v1518 = vrcp.pop %v1468
        %v1519 = vmul.f32 %v1468, %v1518
        %v1520 = vsub.f32 1.0, %v1519
        %v1521 = vmul.f32 %v1518, %v1520
        %v1522 = vadd.f32 %v1518, %v1521
        %vm1523 = vweird.f32 %v1468
        %vm1524 = vweird.f32 %v1518
        %vm1525 = vmor %vm1523, %vm1524
        %v1526 = vsel %vm1525, %v1518, %v1522
        %v1527 = vand.u32 2147483647, %v1468
        %vm1528 = vcmp.eq.f32.partialorder %v1527, 8.507059e+37
        %v1529 = vand.u32 %v1468, 2147483648
        %v1530 = vor.u32 1.1754944e-38, %v1529
        %v1531 = vsel %vm1528, %v1530, %v1526
        %v1532 = vmul.f32 1.0, %v1531
        %v1533 = vrcp.pop %v1469
        %v1534 = vmul.f32 %v1469, %v1533
        %v1535 = vsub.f32 1.0, %v1534
        %v1536 = vmul.f32 %v1533, %v1535
        %v1537 = vadd.f32 %v1533, %v1536
        %vm1538 = vweird.f32 %v1469
        %vm1539 = vweird.f32 %v1533
        %vm1540 = vmor %vm1538, %vm1539
        %v1541 = vsel %vm1540, %v1533, %v1537
        %v1542 = vand.u32 2147483647, %v1469
        %vm1543 = vcmp.eq.f32.partialorder %v1542, 8.507059e+37
        %v1544 = vand.u32 %v1469, 2147483648
        %v1545 = vor.u32 1.1754944e-38, %v1544
        %v1546 = vsel %vm1543, %v1545, %v1541
        %v1547 = vmul.f32 1.0, %v1546
        %v1548 = vrcp.pop %v1470
        %v1549 = vmul.f32 %v1470, %v1548
        %v1550 = vsub.f32 1.0, %v1549
        %v1551 = vmul.f32 %v1548, %v1550
        %v1552 = vadd.f32 %v1548, %v1551
        %vm1553 = vweird.f32 %v1470
        %vm1554 = vweird.f32 %v1548
        %vm1555 = vmor %vm1553, %vm1554
        %v1556 = vsel %vm1555, %v1548, %v1552
        %v1557 = vand.u32 2147483647, %v1470
        %vm1558 = vcmp.eq.f32.partialorder %v1557, 8.507059e+37
        %v1559 = vand.u32 %v1470, 2147483648
        %v1560 = vor.u32 1.1754944e-38, %v1559
        %v1561 = vsel %vm1558, %v1560, %v1556
        %v1562 = vmul.f32 1.0, %v1561
        %v1563 = vrcp.pop %v1471
        %v1564 = vmul.f32 %v1471, %v1563
        %v1565 = vsub.f32 1.0, %v1564
        %v1566 = vmul.f32 %v1563, %v1565
        %v1567 = vadd.f32 %v1563, %v1566
        %vm1568 = vweird.f32 %v1471
        %vm1569 = vweird.f32 %v1563
        %vm1570 = vmor %vm1568, %vm1569
        %v1571 = vsel %vm1570, %v1563, %v1567
        %v1572 = vand.u32 2147483647, %v1471
        %vm1573 = vcmp.eq.f32.partialorder %v1572, 8.507059e+37
        %v1574 = vand.u32 %v1471, 2147483648
        %v1575 = vor.u32 1.1754944e-38, %v1574
        %v1576 = vsel %vm1573, %v1575, %v1571
        %v1577 = vmul.f32 1.0, %v1576
        %v1578 = vrcp.pop %v1472
        %v1579 = vmul.f32 %v1472, %v1578
        %v1580 = vsub.f32 1.0, %v1579
        %v1581 = vmul.f32 %v1578, %v1580
        %v1582 = vadd.f32 %v1578, %v1581
        %vm1583 = vweird.f32 %v1472
        %vm1584 = vweird.f32 %v1578
        %vm1585 = vmor %vm1583, %vm1584
        %v1586 = vsel %vm1585, %v1578, %v1582
        %v1587 = vand.u32 2147483647, %v1472
        %vm1588 = vcmp.eq.f32.partialorder %v1587, 8.507059e+37
        %v1589 = vand.u32 %v1472, 2147483648
        %v1590 = vor.u32 1.1754944e-38, %v1589
        %v1591 = vsel %vm1588, %v1590, %v1586
        %v1592 = vmul.f32 1.0, %v1591
        %v1593 = vmul.f32 %v1426, %v1487
        %v1594 = vmul.f32 %v1428, %v1502
        %v1595 = vmul.f32 %v1430, %v1517
        %v1596 = vmul.f32 %v1432, %v1532
        %v1597 = vmul.f32 %v1434, %v1547
        %v1598 = vmul.f32 %v1436, %v1562
        %v1599 = vmul.f32 %v1438, %v1577
        %v1600 = vmul.f32 %v1440, %v1592
        %v1601 = vmul.f32 %v1450, %v1487
        %v1602 = vmul.f32 %v1452, %v1502
        %v1603 = vmul.f32 %v1454, %v1517
        %v1604 = vmul.f32 %v1456, %v1532
        %v1605 = vmul.f32 %v1458, %v1547
        %v1606 = vmul.f32 %v1460, %v1562
        %v1607 = vmul.f32 %v1462, %v1577
        %v1608 = vmul.f32 %v1464, %v1592
        %v1609 = vmax.f32 %v1323, %v1387
        %v1610 = vmax.f32 %v1326, %v1390
        %v1611 = vmax.f32 %v1329, %v1393
        %v1612 = vmax.f32 %v1332, %v1396
        %v1613 = vmax.f32 %v1335, %v1399
        %v1614 = vmax.f32 %v1338, %v1402
        %v1615 = vmax.f32 %v1341, %v1405
        %v1616 = vmax.f32 %v1344, %v1408
        %v1617 = vsub.f32 %v1323, %v1609
        %v1618 = vsub.f32 %v1326, %v1610
        %v1619 = vsub.f32 %v1329, %v1611
        %v1620 = vsub.f32 %v1332, %v1612
        %v1621 = vsub.f32 %v1335, %v1613
        %v1622 = vsub.f32 %v1338, %v1614
        %v1623 = vsub.f32 %v1341, %v1615
        %v1624 = vsub.f32 %v1344, %v1616
        %v1625 = vmul.f32 %v1617, 1.442695
        %v1626 = vpow.pop %v1625
        %v1627 = vmul.f32 %v1618, 1.442695
        %v1628 = vpow.pop %v1627
        %v1629 = vmul.f32 %v1619, 1.442695
        %v1630 = vpow.pop %v1629
        %v1631 = vmul.f32 %v1620, 1.442695
        %v1632 = vpow.pop %v1631
        %v1633 = vmul.f32 %v1621, 1.442695
        %v1634 = vpow.pop %v1633
        %v1635 = vmul.f32 %v1622, 1.442695
        %v1636 = vpow.pop %v1635
        %v1637 = vmul.f32 %v1623, 1.442695
        %v1638 = vpow.pop %v1637
        %v1639 = vmul.f32 %v1624, 1.442695
        %v1640 = vpow.pop %v1639
        %v1641 = vsub.f32 %v1387, %v1609
        %v1642 = vsub.f32 %v1390, %v1610
        %v1643 = vsub.f32 %v1393, %v1611
        %v1644 = vsub.f32 %v1396, %v1612
        %v1645 = vsub.f32 %v1399, %v1613
        %v1646 = vsub.f32 %v1402, %v1614
        %v1647 = vsub.f32 %v1405, %v1615
        %v1648 = vsub.f32 %v1408, %v1616
        %v1649 = vmul.f32 %v1641, 1.442695
        %v1650 = vpow.pop %v1649
        %v1651 = vmul.f32 %v1642, 1.442695
        %v1652 = vpow.pop %v1651
        %v1653 = vmul.f32 %v1643, 1.442695
        %v1654 = vpow.pop %v1653
        %v1655 = vmul.f32 %v1644, 1.442695
        %v1656 = vpow.pop %v1655
        %v1657 = vmul.f32 %v1645, 1.442695
        %v1658 = vpow.pop %v1657
        %v1659 = vmul.f32 %v1646, 1.442695
        %v1660 = vpow.pop %v1659
        %v1661 = vmul.f32 %v1647, 1.442695
        %v1662 = vpow.pop %v1661
        %v1663 = vmul.f32 %v1648, 1.442695
        %v1664 = vpow.pop %v1663
        %v1665 = vadd.f32 %v1626, %v1650
        %v1666 = vadd.f32 %v1628, %v1652
        %v1667 = vadd.f32 %v1630, %v1654
        %v1668 = vadd.f32 %v1632, %v1656
        %v1669 = vadd.f32 %v1634, %v1658
        %v1670 = vadd.f32 %v1636, %v1660
        %v1671 = vadd.f32 %v1638, %v1662
        %v1672 = vadd.f32 %v1640, %v1664
        %v1673 = vrcp.pop %v1665
        %v1674 = vmul.f32 %v1665, %v1673
        %v1675 = vsub.f32 1.0, %v1674
        %v1676 = vmul.f32 %v1673, %v1675
        %v1677 = vadd.f32 %v1673, %v1676
        %vm1678 = vweird.f32 %v1665
        %vm1679 = vweird.f32 %v1673
        %vm1680 = vmor %vm1678, %vm1679
        %v1681 = vsel %vm1680, %v1673, %v1677
        %v1682 = vand.u32 2147483647, %v1665
        %vm1683 = vcmp.eq.f32.partialorder %v1682, 8.507059e+37
        %v1684 = vand.u32 %v1665, 2147483648
        %v1685 = vor.u32 1.1754944e-38, %v1684
        %v1686 = vsel %vm1683, %v1685, %v1681
        %v1687 = vmul.f32 1.0, %v1686
        %v1688 = vrcp.pop %v1666
        %v1689 = vmul.f32 %v1666, %v1688
        %v1690 = vsub.f32 1.0, %v1689
        %v1691 = vmul.f32 %v1688, %v1690
        %v1692 = vadd.f32 %v1688, %v1691
        %vm1693 = vweird.f32 %v1666
        %vm1694 = vweird.f32 %v1688
        %vm1695 = vmor %vm1693, %vm1694
        %v1696 = vsel %vm1695, %v1688, %v1692
        %v1697 = vand.u32 2147483647, %v1666
        %vm1698 = vcmp.eq.f32.partialorder %v1697, 8.507059e+37
        %v1699 = vand.u32 %v1666, 2147483648
        %v1700 = vor.u32 1.1754944e-38, %v1699
        %v1701 = vsel %vm1698, %v1700, %v1696
        %v1702 = vmul.f32 1.0, %v1701
        %v1703 = vrcp.pop %v1667
        %v1704 = vmul.f32 %v1667, %v1703
        %v1705 = vsub.f32 1.0, %v1704
        %v1706 = vmul.f32 %v1703, %v1705
        %v1707 = vadd.f32 %v1703, %v1706
        %vm1708 = vweird.f32 %v1667
        %vm1709 = vweird.f32 %v1703
        %vm1710 = vmor %vm1708, %vm1709
        %v1711 = vsel %vm1710, %v1703, %v1707
        %v1712 = vand.u32 2147483647, %v1667
        %vm1713 = vcmp.eq.f32.partialorder %v1712, 8.507059e+37
        %v1714 = vand.u32 %v1667, 2147483648
        %v1715 = vor.u32 1.1754944e-38, %v1714
        %v1716 = vsel %vm1713, %v1715, %v1711
        %v1717 = vmul.f32 1.0, %v1716
        %v1718 = vrcp.pop %v1668
        %v1719 = vmul.f32 %v1668, %v1718
        %v1720 = vsub.f32 1.0, %v1719
        %v1721 = vmul.f32 %v1718, %v1720
        %v1722 = vadd.f32 %v1718, %v1721
        %vm1723 = vweird.f32 %v1668
        %vm1724 = vweird.f32 %v1718
        %vm1725 = vmor %vm1723, %vm1724
        %v1726 = vsel %vm1725, %v1718, %v1722
        %v1727 = vand.u32 2147483647, %v1668
        %vm1728 = vcmp.eq.f32.partialorder %v1727, 8.507059e+37
        %v1729 = vand.u32 %v1668, 2147483648
        %v1730 = vor.u32 1.1754944e-38, %v1729
        %v1731 = vsel %vm1728, %v1730, %v1726
        %v1732 = vmul.f32 1.0, %v1731
        %v1733 = vrcp.pop %v1669
        %v1734 = vmul.f32 %v1669, %v1733
        %v1735 = vsub.f32 1.0, %v1734
        %v1736 = vmul.f32 %v1733, %v1735
        %v1737 = vadd.f32 %v1733, %v1736
        %vm1738 = vweird.f32 %v1669
        %vm1739 = vweird.f32 %v1733
        %vm1740 = vmor %vm1738, %vm1739
        %v1741 = vsel %vm1740, %v1733, %v1737
        %v1742 = vand.u32 2147483647, %v1669
        %vm1743 = vcmp.eq.f32.partialorder %v1742, 8.507059e+37
        %v1744 = vand.u32 %v1669, 2147483648
        %v1745 = vor.u32 1.1754944e-38, %v1744
        %v1746 = vsel %vm1743, %v1745, %v1741
        %v1747 = vmul.f32 1.0, %v1746
        %v1748 = vrcp.pop %v1670
        %v1749 = vmul.f32 %v1670, %v1748
        %v1750 = vsub.f32 1.0, %v1749
        %v1751 = vmul.f32 %v1748, %v1750
        %v1752 = vadd.f32 %v1748, %v1751
        %vm1753 = vweird.f32 %v1670
        %vm1754 = vweird.f32 %v1748
        %vm1755 = vmor %vm1753, %vm1754
        %v1756 = vsel %vm1755, %v1748, %v1752
        %v1757 = vand.u32 2147483647, %v1670
        %vm1758 = vcmp.eq.f32.partialorder %v1757, 8.507059e+37
        %v1759 = vand.u32 %v1670, 2147483648
        %v1760 = vor.u32 1.1754944e-38, %v1759
        %v1761 = vsel %vm1758, %v1760, %v1756
        %v1762 = vmul.f32 1.0, %v1761
        %v1763 = vrcp.pop %v1671
        %v1764 = vmul.f32 %v1671, %v1763
        %v1765 = vsub.f32 1.0, %v1764
        %v1766 = vmul.f32 %v1763, %v1765
        %v1767 = vadd.f32 %v1763, %v1766
        %vm1768 = vweird.f32 %v1671
        %vm1769 = vweird.f32 %v1763
        %vm1770 = vmor %vm1768, %vm1769
        %v1771 = vsel %vm1770, %v1763, %v1767
        %v1772 = vand.u32 2147483647, %v1671
        %vm1773 = vcmp.eq.f32.partialorder %v1772, 8.507059e+37
        %v1774 = vand.u32 %v1671, 2147483648
        %v1775 = vor.u32 1.1754944e-38, %v1774
        %v1776 = vsel %vm1773, %v1775, %v1771
        %v1777 = vmul.f32 1.0, %v1776
        %v1778 = vrcp.pop %v1672
        %v1779 = vmul.f32 %v1672, %v1778
        %v1780 = vsub.f32 1.0, %v1779
        %v1781 = vmul.f32 %v1778, %v1780
        %v1782 = vadd.f32 %v1778, %v1781
        %vm1783 = vweird.f32 %v1672
        %vm1784 = vweird.f32 %v1778
        %vm1785 = vmor %vm1783, %vm1784
        %v1786 = vsel %vm1785, %v1778, %v1782
        %v1787 = vand.u32 2147483647, %v1672
        %vm1788 = vcmp.eq.f32.partialorder %v1787, 8.507059e+37
        %v1789 = vand.u32 %v1672, 2147483648
        %v1790 = vor.u32 1.1754944e-38, %v1789
        %v1791 = vsel %vm1788, %v1790, %v1786
        %v1792 = vmul.f32 1.0, %v1791
        %v1793 = vmul.f32 %v1626, %v1687
        %v1794 = vmul.f32 %v1628, %v1702
        %v1795 = vmul.f32 %v1630, %v1717
        %v1796 = vmul.f32 %v1632, %v1732
        %v1797 = vmul.f32 %v1634, %v1747
        %v1798 = vmul.f32 %v1636, %v1762
        %v1799 = vmul.f32 %v1638, %v1777
        %v1800 = vmul.f32 %v1640, %v1792
        %v1801 = vmul.f32 %v1650, %v1687
        %v1802 = vmul.f32 %v1652, %v1702
        %v1803 = vmul.f32 %v1654, %v1717
        %v1804 = vmul.f32 %v1656, %v1732
        %v1805 = vmul.f32 %v1658, %v1747
        %v1806 = vmul.f32 %v1660, %v1762
        %v1807 = vmul.f32 %v1662, %v1777
        %v1808 = vmul.f32 %v1664, %v1792
        %v1809 = vmul.f32 %v656, %v1593
        %v1810 = vmul.f32 %v660, %v1594
        %v1811 = vmul.f32 %v664, %v1595
        %v1812 = vmul.f32 %v668, %v1596
        %v1813 = vmul.f32 %v672, %v1597
        %v1814 = vmul.f32 %v676, %v1598
        %v1815 = vmul.f32 %v680, %v1599
        %v1816 = vmul.f32 %v684, %v1600
        %v1817 = vmul.f32 %v1058, %v1601
        %v1818 = vmul.f32 %v1062, %v1602
        %v1819 = vmul.f32 %v1066, %v1603
        %v1820 = vmul.f32 %v1070, %v1604
        %v1821 = vmul.f32 %v1074, %v1605
        %v1822 = vmul.f32 %v1078, %v1606
        %v1823 = vmul.f32 %v1082, %v1607
        %v1824 = vmul.f32 %v1086, %v1608
        %v1825 = vmul.f32 %v656, %v1793
        %v1826 = vmul.f32 %v660, %v1794
        %v1827 = vmul.f32 %v664, %v1795
        %v1828 = vmul.f32 %v668, %v1796
        %v1829 = vmul.f32 %v672, %v1797
        %v1830 = vmul.f32 %v676, %v1798
        %v1831 = vmul.f32 %v680, %v1799
        %v1832 = vmul.f32 %v684, %v1800
        %v1833 = vmul.f32 %v1058, %v1801
        %v1834 = vmul.f32 %v1062, %v1802
        %v1835 = vmul.f32 %v1066, %v1803
        %v1836 = vmul.f32 %v1070, %v1804
        %v1837 = vmul.f32 %v1074, %v1805
        %v1838 = vmul.f32 %v1078, %v1806
        %v1839 = vmul.f32 %v1082, %v1807
        %v1840 = vmul.f32 %v1086, %v1808
        %v1841 = vadd.f32 %v1809, %v1817
        %v1842 = vadd.f32 %v1810, %v1818
        %v1843 = vadd.f32 %v1811, %v1819
        %v1844 = vadd.f32 %v1812, %v1820
        %v1845 = vadd.f32 %v1813, %v1821
        %v1846 = vadd.f32 %v1814, %v1822
        %v1847 = vadd.f32 %v1815, %v1823
        %v1848 = vadd.f32 %v1816, %v1824
        %v1849 = vadd.f32 %v1825, %v1833
        %v1850 = vadd.f32 %v1826, %v1834
        %v1851 = vadd.f32 %v1827, %v1835
        %v1852 = vadd.f32 %v1828, %v1836
        %v1853 = vadd.f32 %v1829, %v1837
        %v1854 = vadd.f32 %v1830, %v1838
        %v1855 = vadd.f32 %v1831, %v1839
        %v1856 = vadd.f32 %v1832, %v1840
        %1865 = vrot.lane.b32.xlu0 %v1849, 32
        %v1866 = vpop.permute.xlu0 %1865
        %1867 = vrot.lane.b32.xlu0 %v1850, 32
        %v1868 = vpop.permute.xlu0 %1867
        %1869 = vrot.lane.b32.xlu0 %v1851, 32
        %v1870 = vpop.permute.xlu0 %1869
        %1871 = vrot.lane.b32.xlu0 %v1852, 32
        %v1872 = vpop.permute.xlu0 %1871
        %1873 = vrot.lane.b32.xlu0 %v1853, 32
        %v1874 = vpop.permute.xlu0 %1873
        %1875 = vrot.lane.b32.xlu0 %v1854, 32
        %v1876 = vpop.permute.xlu0 %1875
        %1877 = vrot.lane.b32.xlu0 %v1855, 32
        %v1878 = vpop.permute.xlu0 %1877
        %1879 = vrot.lane.b32.xlu0 %v1856, 32
        %v1880 = vpop.permute.xlu0 %1879
        %1897 = vrot.lane.b32.xlu0 %v1809, 64
        %v1898 = vpop.permute.xlu0 %1897
        %1899 = vrot.lane.b32.xlu0 %v1810, 64
        %v1900 = vpop.permute.xlu0 %1899
        %1901 = vrot.lane.b32.xlu0 %v1811, 64
        %v1902 = vpop.permute.xlu0 %1901
        %1903 = vrot.lane.b32.xlu0 %v1812, 64
        %v1904 = vpop.permute.xlu0 %1903
        %1905 = vrot.lane.b32.xlu0 %v1813, 64
        %v1906 = vpop.permute.xlu0 %1905
        %1907 = vrot.lane.b32.xlu0 %v1814, 64
        %v1908 = vpop.permute.xlu0 %1907
        %1909 = vrot.lane.b32.xlu0 %v1815, 64
        %v1910 = vpop.permute.xlu0 %1909
        %1911 = vrot.lane.b32.xlu0 %v1816, 64
        %v1912 = vpop.permute.xlu0 %1911
        %1929 = vrot.lane.b32.xlu0 %v1817, 96
        %v1930 = vpop.permute.xlu0 %1929
        %1931 = vrot.lane.b32.xlu0 %v1818, 96
        %v1932 = vpop.permute.xlu0 %1931
        %1933 = vrot.lane.b32.xlu0 %v1819, 96
        %v1934 = vpop.permute.xlu0 %1933
        %1935 = vrot.lane.b32.xlu0 %v1820, 96
        %v1936 = vpop.permute.xlu0 %1935
        %1937 = vrot.lane.b32.xlu0 %v1821, 96
        %v1938 = vpop.permute.xlu0 %1937
        %1939 = vrot.lane.b32.xlu0 %v1822, 96
        %v1940 = vpop.permute.xlu0 %1939
        %1941 = vrot.lane.b32.xlu0 %v1823, 96
        %v1942 = vpop.permute.xlu0 %1941
        %1943 = vrot.lane.b32.xlu0 %v1824, 96
        %v1944 = vpop.permute.xlu0 %1943
        %1961 = vrot.lane.b32.xlu0 %v1833, 32
        %v1962 = vpop.permute.xlu0 %1961
        %1963 = vrot.lane.b32.xlu0 %v1834, 32
        %v1964 = vpop.permute.xlu0 %1963
        %1965 = vrot.lane.b32.xlu0 %v1835, 32
        %v1966 = vpop.permute.xlu0 %1965
        %1967 = vrot.lane.b32.xlu0 %v1836, 32
        %v1968 = vpop.permute.xlu0 %1967
        %1969 = vrot.lane.b32.xlu0 %v1837, 32
        %v1970 = vpop.permute.xlu0 %1969
        %1971 = vrot.lane.b32.xlu0 %v1838, 32
        %v1972 = vpop.permute.xlu0 %1971
        %1973 = vrot.lane.b32.xlu0 %v1839, 32
        %v1974 = vpop.permute.xlu0 %1973
        %1975 = vrot.lane.b32.xlu0 %v1840, 32
        %v1976 = vpop.permute.xlu0 %1975
        %v1985 = vsel %vm1160, %v1841, %v1866
        %v1986 = vsel %vm1160, %v1842, %v1868
        %v1987 = vsel %vm1160, %v1843, %v1870
        %v1988 = vsel %vm1160, %v1844, %v1872
        %v1989 = vsel %vm1160, %v1845, %v1874
        %v1990 = vsel %vm1160, %v1846, %v1876
        %v1991 = vsel %vm1160, %v1847, %v1878
        %v1992 = vsel %vm1160, %v1848, %v1880
        %vm1993 = vcmask 523264
        %v1994 = vsel %vm1993, %v1985, %v1898
        %v1995 = vsel %vm1993, %v1986, %v1900
        %v1996 = vsel %vm1993, %v1987, %v1902
        %v1997 = vsel %vm1993, %v1988, %v1904
        %v1998 = vsel %vm1993, %v1989, %v1906
        %v1999 = vsel %vm1993, %v1990, %v1908
        %v2000 = vsel %vm1993, %v1991, %v1910
        %v2001 = vsel %vm1993, %v1992, %v1912
        %vm2002 = vcmask 785408
        %v2003 = vsel %vm2002, %v1994, %v1930
        %v2004 = vsel %vm2002, %v1995, %v1932
        %v2005 = vsel %vm2002, %v1996, %v1934
        %v2006 = vsel %vm2002, %v1997, %v1936
        %v2007 = vsel %vm2002, %v1998, %v1938
        %v2008 = vsel %vm2002, %v1999, %v1940
        %v2009 = vsel %vm2002, %v2000, %v1942
        %v2010 = vsel %vm2002, %v2001, %v1944
        %v2011 = vsel %vm1160, %v1825, %v1962
        %v2012 = vsel %vm1160, %v1826, %v1964
        %v2013 = vsel %vm1160, %v1827, %v1966
        %v2014 = vsel %vm1160, %v1828, %v1968
        %v2015 = vsel %vm1160, %v1829, %v1970
        %v2016 = vsel %vm1160, %v1830, %v1972
        %v2017 = vsel %vm1160, %v1831, %v1974
        %v2018 = vsel %vm1160, %v1832, %v1976
        %2019 = vst [vmem:[%s265] sm:$0xff] %v2003
        %2020 = vst.msk [vmem:[%s265 + $0x8] sm:$0xff] %vm1993, %v2011
        %2021 = vst [vmem:[%s265 + $0x10] sm:$0xff] %v2004
        %2022 = vst.msk [vmem:[%s265 + $0x18] sm:$0xff] %vm1993, %v2012
        %2023 = vst [vmem:[%s265 + $0x20] sm:$0xff] %v2005
        %2024 = vst.msk [vmem:[%s265 + $0x28] sm:$0xff] %vm1993, %v2013
        %2025 = vst [vmem:[%s265 + $0x30] sm:$0xff] %v2006
        %2026 = vst.msk [vmem:[%s265 + $0x38] sm:$0xff] %vm1993, %v2014
        %2027 = vst [vmem:[%s265 + $0x40] sm:$0xff] %v2007
        %2028 = vst.msk [vmem:[%s265 + $0x48] sm:$0xff] %vm1993, %v2015
        %2029 = vst [vmem:[%s265 + $0x50] sm:$0xff] %v2008
        %2030 = vst.msk [vmem:[%s265 + $0x58] sm:$0xff] %vm1993, %v2016
        %2031 = vst [vmem:[%s265 + $0x60] sm:$0xff] %v2009
        %2032 = vst.msk [vmem:[%s265 + $0x68] sm:$0xff] %vm1993, %v2017
        %2033 = vst [vmem:[%s265 + $0x70] sm:$0xff] %v2010
        %2034 = vst.msk [vmem:[%s265 + $0x78] sm:$0xff] %vm1993, %v2018
        %s2035 = smul.u32 8, %s21
        %p2036 = scmp.lt.s32.totalorder %s2035, 15
        %s2037 = scalar_select %p2036, %s2035, 15
        %s2038 = smul.addr %s2037, 2
        %s2039 = smul.addr %s2038, 8
        %s2040 = scalar_lea.vmem %s4, %s2039
        // Predicated region
        $region45: #{self_attention.1} parent=35 // pred_check
          %p2041 = pneg %p133
        $region46: #{self_attention.1} parent=35 // pred_check_branch
          %2043 = sbr.rel (%p2041) target = $region48
        $region47: #{self_attention.1} parent=35 // pred_region
          %s2044 = smul.u32 8, %s21
        $region48: #{self_attention.1} parent=35 // pred_fallthru
          _
      $region36: #{self_attention.1} parent=5 // pred_fallthru
        _
      %p2045 = scmp.le.s32.totalorder 2, %s16
      // Predicated region
      $region49: #{self_attention.1} parent=5 // pred_check
        %p2046 = pneg %p2045
      $region50: #{self_attention.1} parent=5 // pred_check_branch
        %2048 = sbr.rel (%p2046) target = $region52
      $region51: #{self_attention.1} parent=5 // pred_region
        %s2049 = ssub.s32 %s16, 2
        // Predicated region
        $region53: #{self_attention.1} parent=51 // pred_check
          %p2050 = pneg %p139
        $region54: #{self_attention.1} parent=51 // pred_check_branch
          %2052 = sbr.rel (%p2050) target = $region56
        $region55: #{self_attention.1} parent=51 // pred_region
          %s2053 = smul.u32 8, %s22
          %p2054 = scmp.lt.s32.totalorder %s2053, 15
          %s2055 = scalar_select %p2054, %s2053, 15
          %s2056 = smul.addr %s2055, 2
          %s2057 = smul.addr %s2056, 8
          %s2058 = scalar_lea.vmem %s4, %s2057
        $region56: #{self_attention.1} parent=51 // pred_fallthru
          _
      $region52: #{self_attention.1} parent=5 // pred_fallthru
        _
    $region6: #{self_attention.1} parent=1 // loop_footer
      %s20 = sadd.s32 1, %s16
    $region7: #{self_attention.1} parent=1 // loop_footer_branch
      %15 = sbr.rel target = $region3
    $region8: #{self_attention.1} parent=1 // loop_exit
      _
    %2059 = vsyncpa [#allocation3], 1
    %s2060 = scalar_lea.sflag [#allocation3], 1
    %2061 = vsyncpa %s2060, 1
    %2062 = vsyncpa [#allocation5], 1
    %s2063 = scalar_lea.sflag [#allocation5], 1
    %2064 = vsyncpa %s2063, 1

</llo_original>
